<compile_context>
chip_gen: v7x
topology: tpu7x:2x2x1
jax: 0.10.0
libtpu: 0.0.40
codegen_flags: <defaults>
</compile_context>

<pallas_src>
import jax
import jax.numpy as jnp
from jax import lax
from jax.experimental import pallas as pl
from jax.experimental.pallas import tpu as pltpu


def _make_kernel(K, stride, padding, H, W, Ho, Wo):
    def kernel(x_ref, wf_ref, o_ref, pad_ref):
        # x_ref  : (1, Cin, H, W)      natural NCHW tile for one batch element
        # wf_ref : (Cout, K*K*Cin)     fused depthwise*pointwise weights
        # o_ref  : (1, Cout, Ho*Wo)    lane-dense output (Ho*Wo on lanes)
        # pad_ref: (Cin, Hp, Wp)       VMEM scratch holding the zero-padded image
        cin = x_ref.shape[1]

        # In-kernel zero padding (no wrapper-side jnp.pad / extra HBM pass).
        pad_ref[...] = jnp.zeros_like(pad_ref)
        pad_ref[:, padding:padding + H, padding:padding + W] = x_ref[0]
        xpad = pad_ref[...]                                    # (Cin, Hp, Wp)

        # im2col: stack the K*K shifted/strided slabs along the leading axis
        # (cheap — leading dim is untiled), then flatten spatial dims ONCE.
        slabs = []
        for kh in range(K):
            for kw in range(K):
                slabs.append(lax.slice(
                    xpad,
                    (0, kh, kw),
                    (cin,
                     kh + (Ho - 1) * stride + 1,
                     kw + (Wo - 1) * stride + 1),
                    (1, stride, stride)))                      # (Cin, Ho, Wo)
        patches = jnp.concatenate(slabs, axis=0)               # (K*K*Cin, Ho, Wo)
        patches = patches.reshape(K * K * cin, Ho * Wo)        # single spatial flatten

        # Fused depthwise + pointwise as one MXU matmul; result is already
        # (Cout, Ho*Wo) — lane-dense, stored with full-width vst.
        out = jnp.dot(wf_ref[...].astype(jnp.float32),
                      patches.astype(jnp.float32),
                      preferred_element_type=jnp.float32)
        o_ref[0] = out.astype(o_ref.dtype)

    return kernel


def depthwise_separable_conv(x_nchw, dw_w, pw_w, *, stride=1, padding=0):
    """x_nchw: (N, Cin, H, W); dw_w: (K, K, Cin); pw_w: (Cin, Cout). Returns NCHW."""
    N, Cin, H, W = x_nchw.shape
    K = dw_w.shape[0]
    Cout = pw_w.shape[1]

    Ho = (H + 2 * padding - K) // stride + 1
    Wo = (W + 2 * padding - K) // stride + 1
    Hp, Wp = H + 2 * padding, W + 2 * padding

    # One-time weight prep (tiny): fuse depthwise into pointwise so the kernel does a
    # single im2col matmul with contraction K*K*Cin instead of Cin.
    #   W_fused[(kh, kw, c), co] = dw[kh, kw, c] * pw[c, co]
    wf = (dw_w[:, :, :, None] * pw_w[None, None, :, :]).reshape(K * K * Cin, Cout)
    wf_t = jnp.transpose(wf, (1, 0))                           # (Cout, K*K*Cin)

    kernel = _make_kernel(K, stride, padding, H, W, Ho, Wo)

    out = pl.pallas_call(
        kernel,
        out_shape=jax.ShapeDtypeStruct((N, Cout, Ho * Wo), x_nchw.dtype),
        grid_spec=pltpu.PrefetchScalarGridSpec(
            num_scalar_prefetch=0,
            grid=(N,),
            in_specs=[
                pl.BlockSpec((1, Cin, H, W), lambda b: (b, 0, 0, 0)),
                pl.BlockSpec((Cout, K * K * Cin), lambda b: (0, 0)),
            ],
            out_specs=pl.BlockSpec((1, Cout, Ho * Wo), lambda b: (b, 0, 0)),
            scratch_shapes=[pltpu.VMEM((Cin, Hp, Wp), x_nchw.dtype)],
        ),
        compiler_params=pltpu.CompilerParams(
            # N parallel steps -> both v7x TensorCores busy; free on v5e/v6e.
            dimension_semantics=("parallel",)),
    )(x_nchw, wf_t)

    # (N, Cout, Ho*Wo) -> (N, Cout, Ho, Wo): trailing-dim split, no data movement.
    return out.reshape(N, Cout, Ho, Wo)


def _reference(x_nchw, dw_w, pw_w, *, stride=1, padding=0):
    """Pure-JAX reference: depthwise conv (groups=Cin) + 1x1 conv, NCHW."""
    Cin = x_nchw.shape[1]
    dw_oihw = jnp.transpose(dw_w, (2, 0, 1))[:, None, :, :]        # (Cin,1,K,K)
    y = lax.conv_general_dilated(
        x_nchw, dw_oihw, window_strides=(stride, stride),
        padding=[(padding, padding), (padding, padding)],
        dimension_numbers=("NCHW", "OIHW", "NCHW"),
        feature_group_count=Cin)
    pw_oihw = jnp.transpose(pw_w, (1, 0))[:, :, None, None]        # (Cout,Cin,1,1)
    return lax.conv_general_dilated(
        y, pw_oihw, window_strides=(1, 1), padding=[(0, 0), (0, 0)],
        dimension_numbers=("NCHW", "OIHW", "NCHW"))


if __name__ == "__main__":
    # Small shapes consistent with the module's forward: NCHW input.
    N, Cin, H, W = 2, 4, 16, 16
    Cout, K, stride, padding = 8, 3, 1, 1

    key = jax.random.PRNGKey(0)
    k_x, k_dw, k_pw = jax.random.split(key, 3)
    x = jax.random.normal(k_x, (N, Cin, H, W), dtype=jnp.float32)
    dw_w = jax.random.normal(k_dw, (K, K, Cin), dtype=jnp.float32) * 0.1
    pw_w = jax.random.normal(k_pw, (Cin, Cout), dtype=jnp.float32) * 0.1

    out = depthwise_separable_conv(x, dw_w, pw_w, stride=stride, padding=padding)
    out = jax.block_until_ready(out)

    ref = _reference(x, dw_w, pw_w, stride=stride, padding=padding)
    assert out.shape == (N, Cout, H, W), out.shape
    assert jnp.allclose(out, ref, atol=2e-4, rtol=2e-4), "mismatch vs reference"

    print("KERNEL_OK")
</pallas_src>

<mosaic_0001>
module attributes {stable_mosaic.version = 11 : i64} {
  func.func @kernel(%arg0: i32, %arg1: memref<1x4x16x16xf32, #tpu.memory_space<vmem>>, %arg2: memref<8x36xf32, #tpu.memory_space<vmem>>, %arg3: memref<1x8x256xf32, #tpu.memory_space<vmem>>, %arg4: memref<4x18x18xf32, #tpu.memory_space<vmem>>) attributes {dimension_semantics = [#tpu.dimension_semantics<parallel>], iteration_bounds = array<i64: 2>, scalar_prefetch = 0 : i64, scratch_operands = 1 : i64, tpu.core_type = #tpu.core_type<tc>, window_params = [{transform_indices = @transform_0, window_bounds = array<i64: 1, 4, 16, 16>}, {pipeline_mode = #tpu.pipeline_mode<synchronous>, transform_indices = @transform_1, window_bounds = array<i64: 8, 36>}, {transform_indices = @transform_2, window_bounds = array<i64: 1, 8, 256>}]} {
    %cst = arith.constant 0.000000e+00 : f32
    %0 = vector.broadcast %cst : f32 to vector<4x18x18xf32>
    %c0 = arith.constant 0 : index
    %c0_0 = arith.constant 0 : index
    %c0_1 = arith.constant 0 : index
    %1 = vector.load %arg4[%c0, %c0_0, %c0_1] : memref<4x18x18xf32, #tpu.memory_space<vmem>>, vector<4x18x18xf32>
    tpu.vector_store %arg4[%c0, %c0_0, %c0_1], %0 {strides = array<i32>} : memref<4x18x18xf32, #tpu.memory_space<vmem>>, vector<4x18x18xf32>,
    %c0_2 = arith.constant 0 : index
    %c0_3 = arith.constant 0 : index
    %c0_4 = arith.constant 0 : index
    %c0_5 = arith.constant 0 : index
    %2 = vector.load %arg1[%c0_2, %c0_3, %c0_4, %c0_5] : memref<1x4x16x16xf32, #tpu.memory_space<vmem>>, vector<1x4x16x16xf32>
    %3 = vector.shape_cast %2 : vector<1x4x16x16xf32> to vector<4x16x16xf32>
    %c0_6 = arith.constant 0 : index
    %c1 = arith.constant 1 : index
    %c1_7 = arith.constant 1 : index
    %4 = vector.load %arg4[%c0_6, %c1, %c1_7] : memref<4x18x18xf32, #tpu.memory_space<vmem>>, vector<4x16x16xf32>
    tpu.vector_store %arg4[%c0_6, %c1, %c1_7], %3 {strides = array<i32>} : memref<4x18x18xf32, #tpu.memory_space<vmem>>, vector<4x16x16xf32>,
    %c0_8 = arith.constant 0 : index
    %c0_9 = arith.constant 0 : index
    %c0_10 = arith.constant 0 : index
    %5 = vector.load %arg4[%c0_8, %c0_9, %c0_10] : memref<4x18x18xf32, #tpu.memory_space<vmem>>, vector<4x18x18xf32>
    %6 = vector.extract_strided_slice %5 {offsets = [0, 0, 0], sizes = [4, 16, 16], strides = [1, 1, 1]} : vector<4x18x18xf32> to vector<4x16x16xf32>
    %7 = vector.extract_strided_slice %5 {offsets = [0, 0, 1], sizes = [4, 16, 16], strides = [1, 1, 1]} : vector<4x18x18xf32> to vector<4x16x16xf32>
    %8 = vector.extract_strided_slice %5 {offsets = [0, 0, 2], sizes = [4, 16, 16], strides = [1, 1, 1]} : vector<4x18x18xf32> to vector<4x16x16xf32>
    %9 = vector.extract_strided_slice %5 {offsets = [0, 1, 0], sizes = [4, 16, 16], strides = [1, 1, 1]} : vector<4x18x18xf32> to vector<4x16x16xf32>
    %10 = vector.extract_strided_slice %5 {offsets = [0, 1, 1], sizes = [4, 16, 16], strides = [1, 1, 1]} : vector<4x18x18xf32> to vector<4x16x16xf32>
    %11 = vector.extract_strided_slice %5 {offsets = [0, 1, 2], sizes = [4, 16, 16], strides = [1, 1, 1]} : vector<4x18x18xf32> to vector<4x16x16xf32>
    %12 = vector.extract_strided_slice %5 {offsets = [0, 2, 0], sizes = [4, 16, 16], strides = [1, 1, 1]} : vector<4x18x18xf32> to vector<4x16x16xf32>
    %13 = vector.extract_strided_slice %5 {offsets = [0, 2, 1], sizes = [4, 16, 16], strides = [1, 1, 1]} : vector<4x18x18xf32> to vector<4x16x16xf32>
    %14 = vector.extract_strided_slice %5 {offsets = [0, 2, 2], sizes = [4, 16, 16], strides = [1, 1, 1]} : vector<4x18x18xf32> to vector<4x16x16xf32>
    %15 = tpu.concatenate %6, %7, %8, %9, %10, %11, %12, %13, %14 in 0 : vector<4x16x16xf32>, vector<4x16x16xf32>, vector<4x16x16xf32>, vector<4x16x16xf32>, vector<4x16x16xf32>, vector<4x16x16xf32>, vector<4x16x16xf32>, vector<4x16x16xf32>, vector<4x16x16xf32> -> vector<36x16x16xf32>
    %16 = vector.shape_cast %15 : vector<36x16x16xf32> to vector<36x256xf32>
    %c0_11 = arith.constant 0 : index
    %c0_12 = arith.constant 0 : index
    %17 = vector.load %arg2[%c0_11, %c0_12] : memref<8x36xf32, #tpu.memory_space<vmem>>, vector<8x36xf32>
    %cst_13 = arith.constant dense<0.000000e+00> : vector<8x256xf32>
    %18 = tpu.matmul %17, %16, %cst_13 {dimension_numbers = #tpu.dot_dimension_numbers<[1], [0], [0], [1], [0, 0, 1, 1], [], []>} : vector<8x36xf32>, vector<36x256xf32>, vector<8x256xf32> -> vector<8x256xf32>
    %c0_14 = arith.constant 0 : index
    %c0_15 = arith.constant 0 : index
    %c0_16 = arith.constant 0 : index
    %19 = vector.load %arg3[%c0_14, %c0_15, %c0_16] : memref<1x8x256xf32, #tpu.memory_space<vmem>>, vector<1x8x256xf32>
    %20 = vector.shape_cast %19 : vector<1x8x256xf32> to vector<8x256xf32>
    %21 = vector.shape_cast %18 : vector<8x256xf32> to vector<1x8x256xf32>
    tpu.vector_store %arg3[%c0_14, %c0_15, %c0_16], %21 {strides = array<i32>} : memref<1x8x256xf32, #tpu.memory_space<vmem>>, vector<1x8x256xf32>,
    return
  }
  func.func @transform_0(%arg0: i32) -> (i32, i32, i32, i32) {
    %c0_i32 = arith.constant 0 : i32
    %c0_i32_0 = arith.constant 0 : i32
    %c0_i32_1 = arith.constant 0 : i32
    %c0_i32_2 = arith.constant 0 : i32
    return %arg0, %c0_i32, %c0_i32_0, %c0_i32_1 : i32, i32, i32, i32
  }
  func.func @transform_1(%arg0: i32) -> (i32, i32) {
    %c0_i32 = arith.constant 0 : i32
    %c0_i32_0 = arith.constant 0 : i32
    %c0_i32_1 = arith.constant 0 : i32
    return %c0_i32, %c0_i32_0 : i32, i32
  }
  func.func @transform_2(%arg0: i32) -> (i32, i32, i32) {
    %c0_i32 = arith.constant 0 : i32
    %c0_i32_0 = arith.constant 0 : i32
    %c0_i32_1 = arith.constant 0 : i32
    return %arg0, %c0_i32, %c0_i32_0 : i32, i32, i32
  }
}

</mosaic_0001>

<llo_original>
// kernel: tpu_custom_call.1
$region0: #{tpu_custom_call.1}
  #allocation0 [shape = 'u32[]', space=smem, size = 0x4, offset = 0x4, fixed_abs, tag = 'smem constant byte address 0x4 - core index']
  #allocation1 [shape = 'u32[144,128]{1,0:T(1,128)}', space=vmem, size = 0x12000, scoped, tag = 'internal scratch']
  #allocation2 [shape = 'f32[4,18,18]{2,1,0:T(8,128)}', space=vmem, size = 0xc000, scoped, tag = 'scratch operand']
  %s0 = inlined_call_operand.hbm [shape: f32[2,4,16,16], index: 0, kind: input, shape index: {}]
  %s1 = inlined_call_operand.hbm [shape: f32[8,36], index: 1, kind: input, shape index: {}]
  %s2 = inlined_call_operand.hbm [shape: f32[2,8,256], index: 2, kind: output, shape index: {}]
  %s3 = sld [smem:[#allocation0]]
  $region49: #{tpu_custom_call.1} parent=0
    _
  %s5 = ssub.s32 1, %s3
  %s6 = scalar_select 0, %s5, %s3
  $region1: #{tpu_custom_call.1} parent=0
    #allocation3 [shape = 'u8[65536]{0}', space=vmem, size = 0x10000, scoped, tag = 'input window, operand 0']
    #allocation4 [shape = 's32[2]{0}', space=sflag, size = 0x8, scoped, tag = 'scoped memory for tpu_custom_call.1']
    #allocation5 [shape = 's32[2]{0}', space=sflag, size = 0x8, scoped, tag = 'scoped memory for tpu_custom_call.1']
    #allocation6 [shape = 'u8[4096]{0}', space=vmem, size = 0x1000, scoped, tag = 'input window, operand 1, single buffered']
    #allocation7 [shape = 's32[1]{0}', space=sflag, size = 0x4, scoped, tag = 'scoped memory for tpu_custom_call.1']
    #allocation8 [shape = 'u8[16384]{0}', space=vmem, size = 0x4000, scoped, tag = 'output window, operand 0']
    %7 = vsyncpa [#allocation4], 0
    %s8 = scalar_lea.sflag [#allocation4], 1
    %9 = vsyncpa %s8, 0
    %10 = vsyncpa [#allocation7], 0
    %11 = vsyncpa [#allocation5], 0
    %s12 = scalar_lea.sflag [#allocation5], 1
    %13 = vsyncpa %s12, 0
    loop: start=0, step=1, limit=4
    $region2: #{tpu_custom_call.1} parent=1 // loop_pre_header
      _
    $region3: #{tpu_custom_call.1} parent=1 // loop_header
      %s15 = sphi 0, %s19
      %p16 = scmp.ge.s32.totalorder %s15, 4
      %s25 = sphi 0, %s27
      %s28 = sphi 0, %s25
      %s29 = sphi 0, %s28
      %s45 = sphi 0, %s29
      %s49 = sphi 0, %s49
      %s51 = sphi 0, %s49
      %s52 = sphi 0, %s51
      %s66 = sphi 0, %s52
      %s72 = sphi 0, %s74
      %s75 = sphi 0, %s72
      %s76 = sphi 0, %s75
      %s92 = sphi 0, %s76
    $region4: #{tpu_custom_call.1} parent=1 // loop_header_branch
      %18 = sbr.rel (%p16) target = $region8
    $region5: #{tpu_custom_call.1} parent=1 // loop_body
      %s20 = ssub.s32 %s15, 1
      %s21 = ssub.s32 %s15, 2
      %s22 = sadd.s32 %s15, 1
      %s23 = ssub.s32 %s15, %s22
      %p24 = scmp.eq.s32.totalorder %s23, 0
      %s26 = sadd.s32 %s25, 1
      %s27 = scalar_select %p24, %s25, %s26
      %p30 = pneg %p24
      %p31 = scmp.eq.s32.totalorder %s15, 1
      %p32 = por %p30, %p31
      %p33 = scmp.ne.s32.totalorder %s25, %s28
      %p34 = scmp.eq.s32.totalorder %s15, 0
      %p35 = por %p33, %p34
      %p36 = scmp.ne.s32.totalorder %s25, %s28
      %p37 = scmp.eq.s32.totalorder %s20, 1
      %p38 = por %p36, %p37
      %p39 = scmp.ne.s32.totalorder %s28, %s29
      %p40 = scmp.eq.s32.totalorder %s20, 0
      %p41 = por %p39, %p40
      %p42 = scmp.ne.s32.totalorder %s28, %s29
      %p43 = scmp.eq.s32.totalorder %s21, 1
      %p44 = por %p42, %p43
      %p46 = scmp.ne.s32.totalorder %s29, %s45
      %p47 = scmp.eq.s32.totalorder %s21, 0
      %p48 = por %p46, %p47
      %s50 = sadd.s32 %s49, 1
      %p53 = scmp.eq.s32.totalorder %s15, 1
      %p54 = scmp.ne.s32.totalorder %s49, %s51
      %p55 = scmp.eq.s32.totalorder %s15, 0
      %p56 = por %p54, %p55
      %p57 = scmp.ne.s32.totalorder %s49, %s51
      %p58 = scmp.eq.s32.totalorder %s20, 1
      %p59 = por %p57, %p58
      %p60 = scmp.ne.s32.totalorder %s51, %s52
      %p61 = scmp.eq.s32.totalorder %s20, 0
      %p62 = por %p60, %p61
      %p63 = scmp.ne.s32.totalorder %s51, %s52
      %p64 = scmp.eq.s32.totalorder %s21, 1
      %p65 = por %p63, %p64
      %p67 = scmp.ne.s32.totalorder %s52, %s66
      %p68 = scmp.eq.s32.totalorder %s21, 0
      %p69 = por %p67, %p68
      %s70 = ssub.s32 %s15, %s22
      %p71 = scmp.eq.s32.totalorder %s70, 0
      %s73 = sadd.s32 %s72, 1
      %s74 = scalar_select %p71, %s72, %s73
      %p77 = pneg %p71
      %p78 = scmp.eq.s32.totalorder %s15, 1
      %p79 = por %p77, %p78
      %p80 = scmp.ne.s32.totalorder %s72, %s75
      %p81 = scmp.eq.s32.totalorder %s15, 0
      %p82 = por %p80, %p81
      %p83 = scmp.ne.s32.totalorder %s72, %s75
      %p84 = scmp.eq.s32.totalorder %s20, 1
      %p85 = por %p83, %p84
      %p86 = scmp.ne.s32.totalorder %s75, %s76
      %p87 = scmp.eq.s32.totalorder %s20, 0
      %p88 = por %p86, %p87
      %p89 = scmp.ne.s32.totalorder %s75, %s76
      %p90 = scmp.eq.s32.totalorder %s21, 1
      %p91 = por %p89, %p90
      %p93 = scmp.ne.s32.totalorder %s76, %s92
      %p94 = scmp.eq.s32.totalorder %s21, 0
      %p95 = por %p93, %p94
      %p96 = scmp.le.s32.totalorder 1, %s15
      %p97 = scmp.lt.s32.totalorder %s15, 3
      %p98 = pnand %p96, %p97
      %p99 = pneg %p98
      // Predicated region
      $region9: #{tpu_custom_call.1} parent=5 // pred_check
        _
      $region10: #{tpu_custom_call.1} parent=5 // pred_check_branch
        %101 = sbr.rel (%p98) target = $region12
      $region11: #{tpu_custom_call.1} parent=5 // pred_region
        %s102 = ssub.s32 %s15, 1
        // Predicated region
        $region13: #{tpu_custom_call.1} parent=11 // pred_check
          %p103 = pneg %p62
        $region14: #{tpu_custom_call.1} parent=11 // pred_check_branch
          %105 = sbr.rel (%p103) target = $region16
        $region15: #{tpu_custom_call.1} parent=11 // pred_region
          %s107 = ssub.s32 128, 128
          %108 = vsyncadd [#allocation7], %s107
          %s110 = sshll.u32 [#allocation6], 4
          %s111 = int_to_ptr.vmem [resolvable:$true] %s110
          %113 = dma.hbm_to_vmem [thread:$0]  %s1, 128, %s111, [#allocation7]
        $region16: #{tpu_custom_call.1} parent=11 // pred_fallthru
          _
      $region12: #{tpu_custom_call.1} parent=5 // pred_fallthru
        _
      %p114 = scmp.lt.s32.totalorder %s15, 2
      // Predicated region
      $region17: #{tpu_custom_call.1} parent=5 // pred_check
        %p115 = pneg %p114
      $region18: #{tpu_custom_call.1} parent=5 // pred_check_branch
        %117 = sbr.rel (%p115) target = $region20
      $region19: #{tpu_custom_call.1} parent=5 // pred_region
        // Predicated region
        $region21: #{tpu_custom_call.1} parent=19 // pred_check
          %p118 = pneg %p35
        $region22: #{tpu_custom_call.1} parent=19 // pred_check_branch
          %120 = sbr.rel (%p118) target = $region24
        $region23: #{tpu_custom_call.1} parent=19 // pred_region
          %s121 = sand.u32 %s25, 1
          %s122 = scalar_lea.sflag [#allocation4], %s121
          %s123 = sand.u32 %s25, 1
          %s124 = smul.addr %s123, 64
          %s125 = scalar_lea.vmem [#allocation3], %s124
          %s127 = ssub.s32 1024, 1024
          %128 = vsyncadd %s122, %s127
          %s129 = smul.addr %s15, 8
          %s130 = smul.addr %s129, 128
          %s131 = scalar_lea.hbm %s0, %s130
          %s132 = sshll.u32 %s125, 4
          %s133 = int_to_ptr.vmem [resolvable:$true] %s132
          %138 = dma.hbm_to_vmem [thread:$0]  %s131, 1024, %s133, %s122, 128, 128, 8
        $region24: #{tpu_custom_call.1} parent=19 // pred_fallthru
          _
      $region20: #{tpu_custom_call.1} parent=5 // pred_fallthru
        _
      %p139 = scmp.le.s32.totalorder 1, %s15
      %p140 = scmp.lt.s32.totalorder %s15, 3
      %p141 = pnand %p139, %p140
      %p142 = pneg %p141
      // Predicated region
      $region25: #{tpu_custom_call.1} parent=5 // pred_check
        _
      $region26: #{tpu_custom_call.1} parent=5 // pred_check_branch
        %144 = sbr.rel (%p141) target = $region28
      $region27: #{tpu_custom_call.1} parent=5 // pred_region
        %s145 = ssub.s32 %s15, 1
        %s146 = sand.u32 %s28, 1
        %s147 = scalar_lea.sflag [#allocation4], %s146
        %s148 = sand.u32 %s28, 1
        %s149 = smul.addr %s148, 64
        %s150 = scalar_lea.vmem [#allocation3], %s149
        // Predicated region
        $region29: #{tpu_custom_call.1} parent=27 // pred_check
          %p151 = pneg %p41
        $region30: #{tpu_custom_call.1} parent=27 // pred_check_branch
          %153 = sbr.rel (%p151) target = $region32
        $region31: #{tpu_custom_call.1} parent=27 // pred_region
          %154 = dma.done %s147, 1024
        $region32: #{tpu_custom_call.1} parent=27 // pred_fallthru
          _
        // Predicated region
        $region33: #{tpu_custom_call.1} parent=27 // pred_check
          %p155 = pneg %p62
        $region34: #{tpu_custom_call.1} parent=27 // pred_check_branch
          %157 = sbr.rel (%p155) target = $region36
        $region35: #{tpu_custom_call.1} parent=27 // pred_region
          %158 = dma.done [#allocation7], 128
        $region36: #{tpu_custom_call.1} parent=27 // pred_fallthru
          _
        %s159 = sand.u32 %s28, 1
        %s160 = scalar_lea.sflag [#allocation4], %s159
        %s161 = sand.u32 %s28, 1
        %s162 = smul.addr %s161, 64
        %s163 = scalar_lea.vmem [#allocation3], %s162
        %p164 = pneg %p41
        %p165 = pneg %p38
        %p166 = pneg %p62
        %p167 = pneg %p59
        %p168 = pneg %p88
        %p169 = pneg %p85
        %s170 = sand.u32 %s75, 1
        %s171 = scalar_lea.sflag [#allocation5], %s170
        %s172 = sand.u32 %s75, 1
        %s173 = smul.addr %s172, 16
        %s174 = scalar_lea.vmem [#allocation8], %s173
        %vm175 = vcmask 146432
        %176 = vst.msk [vmem:[#allocation2] sm:$0xff] %vm175, 0.0
        %177 = vst.msk [vmem:[#allocation2 + $0x8] sm:$0xff] %vm175, 0.0
        %vm178 = vcmask 140288
        %179 = vst.msk [vmem:[#allocation2 + $0x10] sm:$0x3] %vm178, 0.0
        %180 = vst.msk [vmem:[#allocation2 + $0x18] sm:$0xff] %vm175, 0.0
        %181 = vst.msk [vmem:[#allocation2 + $0x20] sm:$0xff] %vm175, 0.0
        %182 = vst.msk [vmem:[#allocation2 + $0x28] sm:$0x3] %vm178, 0.0
        %183 = vst.msk [vmem:[#allocation2 + $0x30] sm:$0xff] %vm175, 0.0
        %184 = vst.msk [vmem:[#allocation2 + $0x38] sm:$0xff] %vm175, 0.0
        %185 = vst.msk [vmem:[#allocation2 + $0x40] sm:$0x3] %vm178, 0.0
        %186 = vst.msk [vmem:[#allocation2 + $0x48] sm:$0xff] %vm175, 0.0
        %187 = vst.msk [vmem:[#allocation2 + $0x50] sm:$0xff] %vm175, 0.0
        %188 = vst.msk [vmem:[#allocation2 + $0x58] sm:$0x3] %vm178, 0.0
        %v189 = vld [vmem:[%s150] sm:$0xff]
        %v190 = vld [vmem:[%s150 + $0x8] sm:$0xff]
        %v191 = vld [vmem:[%s150 + $0x10] sm:$0xff]
        %v192 = vld [vmem:[%s150 + $0x18] sm:$0xff]
        %v193 = vld [vmem:[%s150 + $0x20] sm:$0xff]
        %v194 = vld [vmem:[%s150 + $0x28] sm:$0xff]
        %v195 = vld [vmem:[%s150 + $0x30] sm:$0xff]
        %v196 = vld [vmem:[%s150 + $0x38] sm:$0xff]
        %205 = vrot.lane.b32.xlu0 %v189, 1
        %v206 = vpop.permute.xlu0 %205
        %207 = vrot.lane.b32.xlu0 %v190, 1
        %v208 = vpop.permute.xlu0 %207
        %209 = vrot.lane.b32.xlu0 %v191, 1
        %v210 = vpop.permute.xlu0 %209
        %211 = vrot.lane.b32.xlu0 %v192, 1
        %v212 = vpop.permute.xlu0 %211
        %213 = vrot.lane.b32.xlu0 %v193, 1
        %v214 = vpop.permute.xlu0 %213
        %215 = vrot.lane.b32.xlu0 %v194, 1
        %v216 = vpop.permute.xlu0 %215
        %217 = vrot.lane.b32.xlu0 %v195, 1
        %v218 = vpop.permute.xlu0 %217
        %219 = vrot.lane.b32.xlu0 %v196, 1
        %v220 = vpop.permute.xlu0 %219
        %vm229 = vcmask 138248
        %230 = vst.msk [vmem:[#allocation2 + $0x1] sm:$0xff] %vm229, %v206
        %231 = vst.msk [vmem:[#allocation2 + $0x9] sm:$0xff] %vm229, %v208
        %232 = vst.msk [vmem:[#allocation2 + $0x19] sm:$0xff] %vm229, %v210
        %233 = vst.msk [vmem:[#allocation2 + $0x21] sm:$0xff] %vm229, %v212
        %234 = vst.msk [vmem:[#allocation2 + $0x31] sm:$0xff] %vm229, %v214
        %235 = vst.msk [vmem:[#allocation2 + $0x39] sm:$0xff] %vm229, %v216
        %236 = vst.msk [vmem:[#allocation2 + $0x49] sm:$0xff] %vm229, %v218
        %237 = vst.msk [vmem:[#allocation2 + $0x51] sm:$0xff] %vm229, %v220
        %v238 = vld [vmem:[#allocation2] sm:$0xff]
        %v239 = vld [vmem:[#allocation2 + $0x8] sm:$0xff]
        %v240 = vld [vmem:[#allocation2 + $0x10] sm:$0x3]
        %v241 = vld [vmem:[#allocation2 + $0x18] sm:$0xff]
        %v242 = vld [vmem:[#allocation2 + $0x20] sm:$0xff]
        %v243 = vld [vmem:[#allocation2 + $0x28] sm:$0x3]
        %v244 = vld [vmem:[#allocation2 + $0x30] sm:$0xff]
        %v245 = vld [vmem:[#allocation2 + $0x38] sm:$0xff]
        %v246 = vld [vmem:[#allocation2 + $0x40] sm:$0x3]
        %v247 = vld [vmem:[#allocation2 + $0x48] sm:$0xff]
        %v248 = vld [vmem:[#allocation2 + $0x50] sm:$0xff]
        %v249 = vld [vmem:[#allocation2 + $0x58] sm:$0x3]
        %258 = vrot.lane.b32.xlu0 %v238, 127
        %v259 = vpop.permute.xlu0 %258
        %260 = vrot.lane.b32.xlu0 %v239, 127
        %v261 = vpop.permute.xlu0 %260
        %262 = vrot.lane.b32.xlu0 %v241, 127
        %v263 = vpop.permute.xlu0 %262
        %264 = vrot.lane.b32.xlu0 %v242, 127
        %v265 = vpop.permute.xlu0 %264
        %266 = vrot.lane.b32.xlu0 %v244, 127
        %v267 = vpop.permute.xlu0 %266
        %268 = vrot.lane.b32.xlu0 %v245, 127
        %v269 = vpop.permute.xlu0 %268
        %270 = vrot.lane.b32.xlu0 %v247, 127
        %v271 = vpop.permute.xlu0 %270
        %272 = vrot.lane.b32.xlu0 %v248, 127
        %v273 = vpop.permute.xlu0 %272
        %282 = vrot.lane.b32.xlu0 %v238, 126
        %v283 = vpop.permute.xlu0 %282
        %284 = vrot.lane.b32.xlu0 %v239, 126
        %v285 = vpop.permute.xlu0 %284
        %286 = vrot.lane.b32.xlu0 %v241, 126
        %v287 = vpop.permute.xlu0 %286
        %288 = vrot.lane.b32.xlu0 %v242, 126
        %v289 = vpop.permute.xlu0 %288
        %290 = vrot.lane.b32.xlu0 %v244, 126
        %v291 = vpop.permute.xlu0 %290
        %292 = vrot.lane.b32.xlu0 %v245, 126
        %v293 = vpop.permute.xlu0 %292
        %294 = vrot.lane.b32.xlu0 %v247, 126
        %v295 = vpop.permute.xlu0 %294
        %296 = vrot.lane.b32.xlu0 %v248, 126
        %v297 = vpop.permute.xlu0 %296
        %vm310 = vcmask 1046528
        %v311 = vrot.slane %v238, 1
        %v312 = vrot.slane %v239, 1
        %v313 = vsel %vm310, %v311, %v312
        %v314 = vrot.slane %v240, 1
        %v315 = vsel %vm310, %v312, %v314
        %v316 = vrot.slane %v241, 1
        %v317 = vrot.slane %v242, 1
        %v318 = vsel %vm310, %v316, %v317
        %v319 = vrot.slane %v243, 1
        %v320 = vsel %vm310, %v317, %v319
        %v321 = vrot.slane %v244, 1
        %v322 = vrot.slane %v245, 1
        %v323 = vsel %vm310, %v321, %v322
        %v324 = vrot.slane %v246, 1
        %v325 = vsel %vm310, %v322, %v324
        %v326 = vrot.slane %v247, 1
        %v327 = vrot.slane %v248, 1
        %v328 = vsel %vm310, %v326, %v327
        %v329 = vrot.slane %v249, 1
        %v330 = vsel %vm310, %v327, %v329
        %339 = vrot.lane.b32.xlu0 %v313, 127
        %v340 = vpop.permute.xlu0 %339
        %341 = vrot.lane.b32.xlu0 %v315, 127
        %v342 = vpop.permute.xlu0 %341
        %343 = vrot.lane.b32.xlu0 %v318, 127
        %v344 = vpop.permute.xlu0 %343
        %345 = vrot.lane.b32.xlu0 %v320, 127
        %v346 = vpop.permute.xlu0 %345
        %347 = vrot.lane.b32.xlu0 %v323, 127
        %v348 = vpop.permute.xlu0 %347
        %349 = vrot.lane.b32.xlu0 %v325, 127
        %v350 = vpop.permute.xlu0 %349
        %351 = vrot.lane.b32.xlu0 %v328, 127
        %v352 = vpop.permute.xlu0 %351
        %353 = vrot.lane.b32.xlu0 %v330, 127
        %v354 = vpop.permute.xlu0 %353
        %363 = vrot.lane.b32.xlu0 %v313, 126
        %v364 = vpop.permute.xlu0 %363
        %365 = vrot.lane.b32.xlu0 %v315, 126
        %v366 = vpop.permute.xlu0 %365
        %367 = vrot.lane.b32.xlu0 %v318, 126
        %v368 = vpop.permute.xlu0 %367
        %369 = vrot.lane.b32.xlu0 %v320, 126
        %v370 = vpop.permute.xlu0 %369
        %371 = vrot.lane.b32.xlu0 %v323, 126
        %v372 = vpop.permute.xlu0 %371
        %373 = vrot.lane.b32.xlu0 %v325, 126
        %v374 = vpop.permute.xlu0 %373
        %375 = vrot.lane.b32.xlu0 %v328, 126
        %v376 = vpop.permute.xlu0 %375
        %377 = vrot.lane.b32.xlu0 %v330, 126
        %v378 = vpop.permute.xlu0 %377
        %vm387 = vcmask 1045504
        %v388 = vrot.slane %v238, 2
        %v389 = vrot.slane %v239, 2
        %v390 = vsel %vm387, %v388, %v389
        %v391 = vrot.slane %v240, 2
        %v392 = vsel %vm387, %v389, %v391
        %v393 = vrot.slane %v241, 2
        %v394 = vrot.slane %v242, 2
        %v395 = vsel %vm387, %v393, %v394
        %v396 = vrot.slane %v243, 2
        %v397 = vsel %vm387, %v394, %v396
        %v398 = vrot.slane %v244, 2
        %v399 = vrot.slane %v245, 2
        %v400 = vsel %vm387, %v398, %v399
        %v401 = vrot.slane %v246, 2
        %v402 = vsel %vm387, %v399, %v401
        %v403 = vrot.slane %v247, 2
        %v404 = vrot.slane %v248, 2
        %v405 = vsel %vm387, %v403, %v404
        %v406 = vrot.slane %v249, 2
        %v407 = vsel %vm387, %v404, %v406
        %416 = vrot.lane.b32.xlu0 %v390, 127
        %v417 = vpop.permute.xlu0 %416
        %418 = vrot.lane.b32.xlu0 %v392, 127
        %v419 = vpop.permute.xlu0 %418
        %420 = vrot.lane.b32.xlu0 %v395, 127
        %v421 = vpop.permute.xlu0 %420
        %422 = vrot.lane.b32.xlu0 %v397, 127
        %v423 = vpop.permute.xlu0 %422
        %424 = vrot.lane.b32.xlu0 %v400, 127
        %v425 = vpop.permute.xlu0 %424
        %426 = vrot.lane.b32.xlu0 %v402, 127
        %v427 = vpop.permute.xlu0 %426
        %428 = vrot.lane.b32.xlu0 %v405, 127
        %v429 = vpop.permute.xlu0 %428
        %430 = vrot.lane.b32.xlu0 %v407, 127
        %v431 = vpop.permute.xlu0 %430
        %440 = vrot.lane.b32.xlu0 %v390, 126
        %v441 = vpop.permute.xlu0 %440
        %442 = vrot.lane.b32.xlu0 %v392, 126
        %v443 = vpop.permute.xlu0 %442
        %444 = vrot.lane.b32.xlu0 %v395, 126
        %v445 = vpop.permute.xlu0 %444
        %446 = vrot.lane.b32.xlu0 %v397, 126
        %v447 = vpop.permute.xlu0 %446
        %448 = vrot.lane.b32.xlu0 %v400, 126
        %v449 = vpop.permute.xlu0 %448
        %450 = vrot.lane.b32.xlu0 %v402, 126
        %v451 = vpop.permute.xlu0 %450
        %452 = vrot.lane.b32.xlu0 %v405, 126
        %v453 = vpop.permute.xlu0 %452
        %454 = vrot.lane.b32.xlu0 %v407, 126
        %v455 = vpop.permute.xlu0 %454
        %v464 = vcombine.low %v238, %v244
        %v465 = vcombine.high %v238, %v244
        %v467 = vunpack.c.l.s4 1983009808
        %v468 = vunpack.c.0.s8 %v467
        %v469 = vlaneseq
        %v470 = vshrl.u32 %v469, 7
        %v471 = vsub.s32 %v468, %v470
        %v472 = vrot.slane %v464, %v471
        %v474 = vunpack.c.l.s4 1983009808
        %v475 = vunpack.c.0.s8 %v474
        %v476 = vlaneseq
        %v477 = vshrl.u32 %v476, 7
        %v478 = vsub.s32 %v475, %v477
        %v479 = vrot.slane %v465, %v478
        %v480 = vcombine.low %v241, %v247
        %v481 = vcombine.high %v241, %v247
        %v483 = vunpack.c.l.s4 1983009808
        %v484 = vunpack.c.0.s8 %v483
        %v485 = vlaneseq
        %v486 = vshrl.u32 %v485, 7
        %v487 = vsub.s32 %v484, %v486
        %v488 = vrot.slane %v480, %v487
        %v490 = vunpack.c.l.s4 1983009808
        %v491 = vunpack.c.0.s8 %v490
        %v492 = vlaneseq
        %v493 = vshrl.u32 %v492, 7
        %v494 = vsub.s32 %v491, %v493
        %v495 = vrot.slane %v481, %v494
        %v496 = vcombine.low %v259, %v267
        %v497 = vcombine.high %v259, %v267
        %v499 = vunpack.c.l.s4 1983009808
        %v500 = vunpack.c.0.s8 %v499
        %v501 = vlaneseq
        %v502 = vshrl.u32 %v501, 7
        %v503 = vsub.s32 %v500, %v502
        %v504 = vrot.slane %v496, %v503
        %v506 = vunpack.c.l.s4 1983009808
        %v507 = vunpack.c.0.s8 %v506
        %v508 = vlaneseq
        %v509 = vshrl.u32 %v508, 7
        %v510 = vsub.s32 %v507, %v509
        %v511 = vrot.slane %v497, %v510
        %v512 = vcombine.low %v263, %v271
        %v513 = vcombine.high %v263, %v271
        %v515 = vunpack.c.l.s4 1983009808
        %v516 = vunpack.c.0.s8 %v515
        %v517 = vlaneseq
        %v518 = vshrl.u32 %v517, 7
        %v519 = vsub.s32 %v516, %v518
        %v520 = vrot.slane %v512, %v519
        %v522 = vunpack.c.l.s4 1983009808
        %v523 = vunpack.c.0.s8 %v522
        %v524 = vlaneseq
        %v525 = vshrl.u32 %v524, 7
        %v526 = vsub.s32 %v523, %v525
        %v527 = vrot.slane %v513, %v526
        %v528 = vcombine.low %v472, %v488
        %v529 = vcombine.high %v472, %v488
        %v531 = vunpack.c.l.s4 1934713408
        %v532 = vunpack.c.0.s8 %v531
        %v533 = vlaneseq
        %v534 = vshrl.u32 %v533, 7
        %v535 = vsub.s32 %v532, %v534
        %v536 = vrot.slane %v528, %v535
        %v538 = vunpack.c.l.s4 1934713408
        %v539 = vunpack.c.0.s8 %v538
        %v540 = vlaneseq
        %v541 = vshrl.u32 %v540, 7
        %v542 = vsub.s32 %v539, %v541
        %v543 = vrot.slane %v529, %v542
        %v544 = vcombine.low %v479, %v495
        %v545 = vcombine.high %v479, %v495
        %v547 = vunpack.c.l.s4 1934713408
        %v548 = vunpack.c.0.s8 %v547
        %v549 = vlaneseq
        %v550 = vshrl.u32 %v549, 7
        %v551 = vsub.s32 %v548, %v550
        %v552 = vrot.slane %v544, %v551
        %v554 = vunpack.c.l.s4 1934713408
        %v555 = vunpack.c.0.s8 %v554
        %v556 = vlaneseq
        %v557 = vshrl.u32 %v556, 7
        %v558 = vsub.s32 %v555, %v557
        %v559 = vrot.slane %v545, %v558
        %v560 = vcombine.low %v504, %v520
        %v561 = vcombine.high %v504, %v520
        %v563 = vunpack.c.l.s4 1934713408
        %v564 = vunpack.c.0.s8 %v563
        %v565 = vlaneseq
        %v566 = vshrl.u32 %v565, 7
        %v567 = vsub.s32 %v564, %v566
        %v568 = vrot.slane %v560, %v567
        %v570 = vunpack.c.l.s4 1934713408
        %v571 = vunpack.c.0.s8 %v570
        %v572 = vlaneseq
        %v573 = vshrl.u32 %v572, 7
        %v574 = vsub.s32 %v571, %v573
        %v575 = vrot.slane %v561, %v574
        %v576 = vcombine.low %v511, %v527
        %v577 = vcombine.high %v511, %v527
        %v579 = vunpack.c.l.s4 1934713408
        %v580 = vunpack.c.0.s8 %v579
        %v581 = vlaneseq
        %v582 = vshrl.u32 %v581, 7
        %v583 = vsub.s32 %v580, %v582
        %v584 = vrot.slane %v576, %v583
        %v586 = vunpack.c.l.s4 1934713408
        %v587 = vunpack.c.0.s8 %v586
        %v588 = vlaneseq
        %v589 = vshrl.u32 %v588, 7
        %v590 = vsub.s32 %v587, %v589
        %v591 = vrot.slane %v577, %v590
        %v592 = vcombine.low %v536, %v568
        %v593 = vcombine.high %v536, %v568
        %v594 = vcombine.low %v543, %v575
        %v595 = vcombine.high %v543, %v575
        %v596 = vcombine.low %v552, %v584
        %v597 = vcombine.high %v552, %v584
        %v598 = vcombine.low %v559, %v591
        %v599 = vcombine.high %v559, %v591
        %v600 = vcombine.low %v283, %v291
        %v601 = vcombine.high %v283, %v291
        %v603 = vunpack.c.l.s4 1983009808
        %v604 = vunpack.c.0.s8 %v603
        %v605 = vlaneseq
        %v606 = vshrl.u32 %v605, 7
        %v607 = vsub.s32 %v604, %v606
        %v608 = vrot.slane %v600, %v607
        %v610 = vunpack.c.l.s4 1983009808
        %v611 = vunpack.c.0.s8 %v610
        %v612 = vlaneseq
        %v613 = vshrl.u32 %v612, 7
        %v614 = vsub.s32 %v611, %v613
        %v615 = vrot.slane %v601, %v614
        %v616 = vcombine.low %v287, %v295
        %v617 = vcombine.high %v287, %v295
        %v619 = vunpack.c.l.s4 1983009808
        %v620 = vunpack.c.0.s8 %v619
        %v621 = vlaneseq
        %v622 = vshrl.u32 %v621, 7
        %v623 = vsub.s32 %v620, %v622
        %v624 = vrot.slane %v616, %v623
        %v626 = vunpack.c.l.s4 1983009808
        %v627 = vunpack.c.0.s8 %v626
        %v628 = vlaneseq
        %v629 = vshrl.u32 %v628, 7
        %v630 = vsub.s32 %v627, %v629
        %v631 = vrot.slane %v617, %v630
        %v632 = vcombine.low %v313, %v323
        %v633 = vcombine.high %v313, %v323
        %v635 = vunpack.c.l.s4 1983009808
        %v636 = vunpack.c.0.s8 %v635
        %v637 = vlaneseq
        %v638 = vshrl.u32 %v637, 7
        %v639 = vsub.s32 %v636, %v638
        %v640 = vrot.slane %v632, %v639
        %v642 = vunpack.c.l.s4 1983009808
        %v643 = vunpack.c.0.s8 %v642
        %v644 = vlaneseq
        %v645 = vshrl.u32 %v644, 7
        %v646 = vsub.s32 %v643, %v645
        %v647 = vrot.slane %v633, %v646
        %v648 = vcombine.low %v318, %v328
        %v649 = vcombine.high %v318, %v328
        %v651 = vunpack.c.l.s4 1983009808
        %v652 = vunpack.c.0.s8 %v651
        %v653 = vlaneseq
        %v654 = vshrl.u32 %v653, 7
        %v655 = vsub.s32 %v652, %v654
        %v656 = vrot.slane %v648, %v655
        %v658 = vunpack.c.l.s4 1983009808
        %v659 = vunpack.c.0.s8 %v658
        %v660 = vlaneseq
        %v661 = vshrl.u32 %v660, 7
        %v662 = vsub.s32 %v659, %v661
        %v663 = vrot.slane %v649, %v662
        %v664 = vcombine.low %v608, %v624
        %v665 = vcombine.high %v608, %v624
        %v667 = vunpack.c.l.s4 1934713408
        %v668 = vunpack.c.0.s8 %v667
        %v669 = vlaneseq
        %v670 = vshrl.u32 %v669, 7
        %v671 = vsub.s32 %v668, %v670
        %v672 = vrot.slane %v664, %v671
        %v674 = vunpack.c.l.s4 1934713408
        %v675 = vunpack.c.0.s8 %v674
        %v676 = vlaneseq
        %v677 = vshrl.u32 %v676, 7
        %v678 = vsub.s32 %v675, %v677
        %v679 = vrot.slane %v665, %v678
        %v680 = vcombine.low %v615, %v631
        %v681 = vcombine.high %v615, %v631
        %v683 = vunpack.c.l.s4 1934713408
        %v684 = vunpack.c.0.s8 %v683
        %v685 = vlaneseq
        %v686 = vshrl.u32 %v685, 7
        %v687 = vsub.s32 %v684, %v686
        %v688 = vrot.slane %v680, %v687
        %v690 = vunpack.c.l.s4 1934713408
        %v691 = vunpack.c.0.s8 %v690
        %v692 = vlaneseq
        %v693 = vshrl.u32 %v692, 7
        %v694 = vsub.s32 %v691, %v693
        %v695 = vrot.slane %v681, %v694
        %v696 = vcombine.low %v640, %v656
        %v697 = vcombine.high %v640, %v656
        %v699 = vunpack.c.l.s4 1934713408
        %v700 = vunpack.c.0.s8 %v699
        %v701 = vlaneseq
        %v702 = vshrl.u32 %v701, 7
        %v703 = vsub.s32 %v700, %v702
        %v704 = vrot.slane %v696, %v703
        %v706 = vunpack.c.l.s4 1934713408
        %v707 = vunpack.c.0.s8 %v706
        %v708 = vlaneseq
        %v709 = vshrl.u32 %v708, 7
        %v710 = vsub.s32 %v707, %v709
        %v711 = vrot.slane %v697, %v710
        %v712 = vcombine.low %v647, %v663
        %v713 = vcombine.high %v647, %v663
        %v715 = vunpack.c.l.s4 1934713408
        %v716 = vunpack.c.0.s8 %v715
        %v717 = vlaneseq
        %v718 = vshrl.u32 %v717, 7
        %v719 = vsub.s32 %v716, %v718
        %v720 = vrot.slane %v712, %v719
        %v722 = vunpack.c.l.s4 1934713408
        %v723 = vunpack.c.0.s8 %v722
        %v724 = vlaneseq
        %v725 = vshrl.u32 %v724, 7
        %v726 = vsub.s32 %v723, %v725
        %v727 = vrot.slane %v713, %v726
        %v728 = vcombine.low %v672, %v704
        %v729 = vcombine.high %v672, %v704
        %v730 = vcombine.low %v679, %v711
        %v731 = vcombine.high %v679, %v711
        %v732 = vcombine.low %v688, %v720
        %v733 = vcombine.high %v688, %v720
        %v734 = vcombine.low %v695, %v727
        %v735 = vcombine.high %v695, %v727
        %v736 = vcombine.low %v340, %v348
        %v737 = vcombine.high %v340, %v348
        %v739 = vunpack.c.l.s4 1983009808
        %v740 = vunpack.c.0.s8 %v739
        %v741 = vlaneseq
        %v742 = vshrl.u32 %v741, 7
        %v743 = vsub.s32 %v740, %v742
        %v744 = vrot.slane %v736, %v743
        %v746 = vunpack.c.l.s4 1983009808
        %v747 = vunpack.c.0.s8 %v746
        %v748 = vlaneseq
        %v749 = vshrl.u32 %v748, 7
        %v750 = vsub.s32 %v747, %v749
        %v751 = vrot.slane %v737, %v750
        %v752 = vcombine.low %v344, %v352
        %v753 = vcombine.high %v344, %v352
        %v755 = vunpack.c.l.s4 1983009808
        %v756 = vunpack.c.0.s8 %v755
        %v757 = vlaneseq
        %v758 = vshrl.u32 %v757, 7
        %v759 = vsub.s32 %v756, %v758
        %v760 = vrot.slane %v752, %v759
        %v762 = vunpack.c.l.s4 1983009808
        %v763 = vunpack.c.0.s8 %v762
        %v764 = vlaneseq
        %v765 = vshrl.u32 %v764, 7
        %v766 = vsub.s32 %v763, %v765
        %v767 = vrot.slane %v753, %v766
        %v768 = vcombine.low %v364, %v372
        %v769 = vcombine.high %v364, %v372
        %v771 = vunpack.c.l.s4 1983009808
        %v772 = vunpack.c.0.s8 %v771
        %v773 = vlaneseq
        %v774 = vshrl.u32 %v773, 7
        %v775 = vsub.s32 %v772, %v774
        %v776 = vrot.slane %v768, %v775
        %v778 = vunpack.c.l.s4 1983009808
        %v779 = vunpack.c.0.s8 %v778
        %v780 = vlaneseq
        %v781 = vshrl.u32 %v780, 7
        %v782 = vsub.s32 %v779, %v781
        %v783 = vrot.slane %v769, %v782
        %v784 = vcombine.low %v368, %v376
        %v785 = vcombine.high %v368, %v376
        %v787 = vunpack.c.l.s4 1983009808
        %v788 = vunpack.c.0.s8 %v787
        %v789 = vlaneseq
        %v790 = vshrl.u32 %v789, 7
        %v791 = vsub.s32 %v788, %v790
        %v792 = vrot.slane %v784, %v791
        %v794 = vunpack.c.l.s4 1983009808
        %v795 = vunpack.c.0.s8 %v794
        %v796 = vlaneseq
        %v797 = vshrl.u32 %v796, 7
        %v798 = vsub.s32 %v795, %v797
        %v799 = vrot.slane %v785, %v798
        %v800 = vcombine.low %v744, %v760
        %v801 = vcombine.high %v744, %v760
        %v803 = vunpack.c.l.s4 1934713408
        %v804 = vunpack.c.0.s8 %v803
        %v805 = vlaneseq
        %v806 = vshrl.u32 %v805, 7
        %v807 = vsub.s32 %v804, %v806
        %v808 = vrot.slane %v800, %v807
        %v810 = vunpack.c.l.s4 1934713408
        %v811 = vunpack.c.0.s8 %v810
        %v812 = vlaneseq
        %v813 = vshrl.u32 %v812, 7
        %v814 = vsub.s32 %v811, %v813
        %v815 = vrot.slane %v801, %v814
        %v816 = vcombine.low %v751, %v767
        %v817 = vcombine.high %v751, %v767
        %v819 = vunpack.c.l.s4 1934713408
        %v820 = vunpack.c.0.s8 %v819
        %v821 = vlaneseq
        %v822 = vshrl.u32 %v821, 7
        %v823 = vsub.s32 %v820, %v822
        %v824 = vrot.slane %v816, %v823
        %v826 = vunpack.c.l.s4 1934713408
        %v827 = vunpack.c.0.s8 %v826
        %v828 = vlaneseq
        %v829 = vshrl.u32 %v828, 7
        %v830 = vsub.s32 %v827, %v829
        %v831 = vrot.slane %v817, %v830
        %v832 = vcombine.low %v776, %v792
        %v833 = vcombine.high %v776, %v792
        %v835 = vunpack.c.l.s4 1934713408
        %v836 = vunpack.c.0.s8 %v835
        %v837 = vlaneseq
        %v838 = vshrl.u32 %v837, 7
        %v839 = vsub.s32 %v836, %v838
        %v840 = vrot.slane %v832, %v839
        %v842 = vunpack.c.l.s4 1934713408
        %v843 = vunpack.c.0.s8 %v842
        %v844 = vlaneseq
        %v845 = vshrl.u32 %v844, 7
        %v846 = vsub.s32 %v843, %v845
        %v847 = vrot.slane %v833, %v846
        %v848 = vcombine.low %v783, %v799
        %v849 = vcombine.high %v783, %v799
        %v851 = vunpack.c.l.s4 1934713408
        %v852 = vunpack.c.0.s8 %v851
        %v853 = vlaneseq
        %v854 = vshrl.u32 %v853, 7
        %v855 = vsub.s32 %v852, %v854
        %v856 = vrot.slane %v848, %v855
        %v858 = vunpack.c.l.s4 1934713408
        %v859 = vunpack.c.0.s8 %v858
        %v860 = vlaneseq
        %v861 = vshrl.u32 %v860, 7
        %v862 = vsub.s32 %v859, %v861
        %v863 = vrot.slane %v849, %v862
        %v864 = vcombine.low %v808, %v840
        %v865 = vcombine.high %v808, %v840
        %v866 = vcombine.low %v815, %v847
        %v867 = vcombine.high %v815, %v847
        %v868 = vcombine.low %v824, %v856
        %v869 = vcombine.high %v824, %v856
        %v870 = vcombine.low %v831, %v863
        %v871 = vcombine.high %v831, %v863
        %v872 = vcombine.low %v390, %v400
        %v873 = vcombine.high %v390, %v400
        %v875 = vunpack.c.l.s4 1983009808
        %v876 = vunpack.c.0.s8 %v875
        %v877 = vlaneseq
        %v878 = vshrl.u32 %v877, 7
        %v879 = vsub.s32 %v876, %v878
        %v880 = vrot.slane %v872, %v879
        %v882 = vunpack.c.l.s4 1983009808
        %v883 = vunpack.c.0.s8 %v882
        %v884 = vlaneseq
        %v885 = vshrl.u32 %v884, 7
        %v886 = vsub.s32 %v883, %v885
        %v887 = vrot.slane %v873, %v886
        %v888 = vcombine.low %v395, %v405
        %v889 = vcombine.high %v395, %v405
        %v891 = vunpack.c.l.s4 1983009808
        %v892 = vunpack.c.0.s8 %v891
        %v893 = vlaneseq
        %v894 = vshrl.u32 %v893, 7
        %v895 = vsub.s32 %v892, %v894
        %v896 = vrot.slane %v888, %v895
        %v898 = vunpack.c.l.s4 1983009808
        %v899 = vunpack.c.0.s8 %v898
        %v900 = vlaneseq
        %v901 = vshrl.u32 %v900, 7
        %v902 = vsub.s32 %v899, %v901
        %v903 = vrot.slane %v889, %v902
        %v904 = vcombine.low %v417, %v425
        %v905 = vcombine.high %v417, %v425
        %v907 = vunpack.c.l.s4 1983009808
        %v908 = vunpack.c.0.s8 %v907
        %v909 = vlaneseq
        %v910 = vshrl.u32 %v909, 7
        %v911 = vsub.s32 %v908, %v910
        %v912 = vrot.slane %v904, %v911
        %v914 = vunpack.c.l.s4 1983009808
        %v915 = vunpack.c.0.s8 %v914
        %v916 = vlaneseq
        %v917 = vshrl.u32 %v916, 7
        %v918 = vsub.s32 %v915, %v917
        %v919 = vrot.slane %v905, %v918
        %v920 = vcombine.low %v421, %v429
        %v921 = vcombine.high %v421, %v429
        %v923 = vunpack.c.l.s4 1983009808
        %v924 = vunpack.c.0.s8 %v923
        %v925 = vlaneseq
        %v926 = vshrl.u32 %v925, 7
        %v927 = vsub.s32 %v924, %v926
        %v928 = vrot.slane %v920, %v927
        %v930 = vunpack.c.l.s4 1983009808
        %v931 = vunpack.c.0.s8 %v930
        %v932 = vlaneseq
        %v933 = vshrl.u32 %v932, 7
        %v934 = vsub.s32 %v931, %v933
        %v935 = vrot.slane %v921, %v934
        %v936 = vcombine.low %v880, %v896
        %v937 = vcombine.high %v880, %v896
        %v939 = vunpack.c.l.s4 1934713408
        %v940 = vunpack.c.0.s8 %v939
        %v941 = vlaneseq
        %v942 = vshrl.u32 %v941, 7
        %v943 = vsub.s32 %v940, %v942
        %v944 = vrot.slane %v936, %v943
        %v946 = vunpack.c.l.s4 1934713408
        %v947 = vunpack.c.0.s8 %v946
        %v948 = vlaneseq
        %v949 = vshrl.u32 %v948, 7
        %v950 = vsub.s32 %v947, %v949
        %v951 = vrot.slane %v937, %v950
        %v952 = vcombine.low %v887, %v903
        %v953 = vcombine.high %v887, %v903
        %v955 = vunpack.c.l.s4 1934713408
        %v956 = vunpack.c.0.s8 %v955
        %v957 = vlaneseq
        %v958 = vshrl.u32 %v957, 7
        %v959 = vsub.s32 %v956, %v958
        %v960 = vrot.slane %v952, %v959
        %v962 = vunpack.c.l.s4 1934713408
        %v963 = vunpack.c.0.s8 %v962
        %v964 = vlaneseq
        %v965 = vshrl.u32 %v964, 7
        %v966 = vsub.s32 %v963, %v965
        %v967 = vrot.slane %v953, %v966
        %v968 = vcombine.low %v912, %v928
        %v969 = vcombine.high %v912, %v928
        %v971 = vunpack.c.l.s4 1934713408
        %v972 = vunpack.c.0.s8 %v971
        %v973 = vlaneseq
        %v974 = vshrl.u32 %v973, 7
        %v975 = vsub.s32 %v972, %v974
        %v976 = vrot.slane %v968, %v975
        %v978 = vunpack.c.l.s4 1934713408
        %v979 = vunpack.c.0.s8 %v978
        %v980 = vlaneseq
        %v981 = vshrl.u32 %v980, 7
        %v982 = vsub.s32 %v979, %v981
        %v983 = vrot.slane %v969, %v982
        %v984 = vcombine.low %v919, %v935
        %v985 = vcombine.high %v919, %v935
        %v987 = vunpack.c.l.s4 1934713408
        %v988 = vunpack.c.0.s8 %v987
        %v989 = vlaneseq
        %v990 = vshrl.u32 %v989, 7
        %v991 = vsub.s32 %v988, %v990
        %v992 = vrot.slane %v984, %v991
        %v994 = vunpack.c.l.s4 1934713408
        %v995 = vunpack.c.0.s8 %v994
        %v996 = vlaneseq
        %v997 = vshrl.u32 %v996, 7
        %v998 = vsub.s32 %v995, %v997
        %v999 = vrot.slane %v985, %v998
        %v1000 = vcombine.low %v944, %v976
        %v1001 = vcombine.high %v944, %v976
        %v1002 = vcombine.low %v951, %v983
        %v1003 = vcombine.high %v951, %v983
        %v1004 = vcombine.low %v960, %v992
        %v1005 = vcombine.high %v960, %v992
        %v1006 = vcombine.low %v967, %v999
        %v1007 = vcombine.high %v967, %v999
        %v1008 = vcombine.low %v441, %v449
        %v1009 = vcombine.high %v441, %v449
        %v1011 = vunpack.c.l.s4 1983009808
        %v1012 = vunpack.c.0.s8 %v1011
        %v1013 = vlaneseq
        %v1014 = vshrl.u32 %v1013, 7
        %v1015 = vsub.s32 %v1012, %v1014
        %v1016 = vrot.slane %v1008, %v1015
        %v1018 = vunpack.c.l.s4 1983009808
        %v1019 = vunpack.c.0.s8 %v1018
        %v1020 = vlaneseq
        %v1021 = vshrl.u32 %v1020, 7
        %v1022 = vsub.s32 %v1019, %v1021
        %v1023 = vrot.slane %v1009, %v1022
        %v1024 = vcombine.low %v445, %v453
        %v1025 = vcombine.high %v445, %v453
        %v1027 = vunpack.c.l.s4 1983009808
        %v1028 = vunpack.c.0.s8 %v1027
        %v1029 = vlaneseq
        %v1030 = vshrl.u32 %v1029, 7
        %v1031 = vsub.s32 %v1028, %v1030
        %v1032 = vrot.slane %v1024, %v1031
        %v1034 = vunpack.c.l.s4 1983009808
        %v1035 = vunpack.c.0.s8 %v1034
        %v1036 = vlaneseq
        %v1037 = vshrl.u32 %v1036, 7
        %v1038 = vsub.s32 %v1035, %v1037
        %v1039 = vrot.slane %v1025, %v1038
        %v1040 = vcombine.low %v1016, %v1032
        %v1041 = vcombine.high %v1016, %v1032
        %v1043 = vunpack.c.l.s4 1934713408
        %v1044 = vunpack.c.0.s8 %v1043
        %v1045 = vlaneseq
        %v1046 = vshrl.u32 %v1045, 7
        %v1047 = vsub.s32 %v1044, %v1046
        %v1048 = vrot.slane %v1040, %v1047
        %v1050 = vunpack.c.l.s4 1934713408
        %v1051 = vunpack.c.0.s8 %v1050
        %v1052 = vlaneseq
        %v1053 = vshrl.u32 %v1052, 7
        %v1054 = vsub.s32 %v1051, %v1053
        %v1055 = vrot.slane %v1041, %v1054
        %v1056 = vcombine.low %v1023, %v1039
        %v1057 = vcombine.high %v1023, %v1039
        %v1059 = vunpack.c.l.s4 1934713408
        %v1060 = vunpack.c.0.s8 %v1059
        %v1061 = vlaneseq
        %v1062 = vshrl.u32 %v1061, 7
        %v1063 = vsub.s32 %v1060, %v1062
        %v1064 = vrot.slane %v1056, %v1063
        %v1066 = vunpack.c.l.s4 1934713408
        %v1067 = vunpack.c.0.s8 %v1066
        %v1068 = vlaneseq
        %v1069 = vshrl.u32 %v1068, 7
        %v1070 = vsub.s32 %v1067, %v1069
        %v1071 = vrot.slane %v1057, %v1070
        %v1072 = vcombine.high %v1048, 0.0
        %v1073 = vcombine.high %v1055, 0.0
        %v1074 = vcombine.high %v1064, 0.0
        %v1075 = vcombine.high %v1071, 0.0
        %v1076 = vcombine.low %v239, %v245
        %v1077 = vcombine.high %v239, %v245
        %v1079 = vunpack.c.l.s4 1983009808
        %v1080 = vunpack.c.0.s8 %v1079
        %v1081 = vlaneseq
        %v1082 = vshrl.u32 %v1081, 7
        %v1083 = vsub.s32 %v1080, %v1082
        %v1084 = vrot.slane %v1076, %v1083
        %v1086 = vunpack.c.l.s4 1983009808
        %v1087 = vunpack.c.0.s8 %v1086
        %v1088 = vlaneseq
        %v1089 = vshrl.u32 %v1088, 7
        %v1090 = vsub.s32 %v1087, %v1089
        %v1091 = vrot.slane %v1077, %v1090
        %v1092 = vcombine.low %v242, %v248
        %v1093 = vcombine.high %v242, %v248
        %v1095 = vunpack.c.l.s4 1983009808
        %v1096 = vunpack.c.0.s8 %v1095
        %v1097 = vlaneseq
        %v1098 = vshrl.u32 %v1097, 7
        %v1099 = vsub.s32 %v1096, %v1098
        %v1100 = vrot.slane %v1092, %v1099
        %v1102 = vunpack.c.l.s4 1983009808
        %v1103 = vunpack.c.0.s8 %v1102
        %v1104 = vlaneseq
        %v1105 = vshrl.u32 %v1104, 7
        %v1106 = vsub.s32 %v1103, %v1105
        %v1107 = vrot.slane %v1093, %v1106
        %v1108 = vcombine.low %v261, %v269
        %v1109 = vcombine.high %v261, %v269
        %v1111 = vunpack.c.l.s4 1983009808
        %v1112 = vunpack.c.0.s8 %v1111
        %v1113 = vlaneseq
        %v1114 = vshrl.u32 %v1113, 7
        %v1115 = vsub.s32 %v1112, %v1114
        %v1116 = vrot.slane %v1108, %v1115
        %v1118 = vunpack.c.l.s4 1983009808
        %v1119 = vunpack.c.0.s8 %v1118
        %v1120 = vlaneseq
        %v1121 = vshrl.u32 %v1120, 7
        %v1122 = vsub.s32 %v1119, %v1121
        %v1123 = vrot.slane %v1109, %v1122
        %v1124 = vcombine.low %v265, %v273
        %v1125 = vcombine.high %v265, %v273
        %v1127 = vunpack.c.l.s4 1983009808
        %v1128 = vunpack.c.0.s8 %v1127
        %v1129 = vlaneseq
        %v1130 = vshrl.u32 %v1129, 7
        %v1131 = vsub.s32 %v1128, %v1130
        %v1132 = vrot.slane %v1124, %v1131
        %v1134 = vunpack.c.l.s4 1983009808
        %v1135 = vunpack.c.0.s8 %v1134
        %v1136 = vlaneseq
        %v1137 = vshrl.u32 %v1136, 7
        %v1138 = vsub.s32 %v1135, %v1137
        %v1139 = vrot.slane %v1125, %v1138
        %v1140 = vcombine.low %v1084, %v1100
        %v1141 = vcombine.high %v1084, %v1100
        %v1143 = vunpack.c.l.s4 1934713408
        %v1144 = vunpack.c.0.s8 %v1143
        %v1145 = vlaneseq
        %v1146 = vshrl.u32 %v1145, 7
        %v1147 = vsub.s32 %v1144, %v1146
        %v1148 = vrot.slane %v1140, %v1147
        %v1150 = vunpack.c.l.s4 1934713408
        %v1151 = vunpack.c.0.s8 %v1150
        %v1152 = vlaneseq
        %v1153 = vshrl.u32 %v1152, 7
        %v1154 = vsub.s32 %v1151, %v1153
        %v1155 = vrot.slane %v1141, %v1154
        %v1156 = vcombine.low %v1091, %v1107
        %v1157 = vcombine.high %v1091, %v1107
        %v1159 = vunpack.c.l.s4 1934713408
        %v1160 = vunpack.c.0.s8 %v1159
        %v1161 = vlaneseq
        %v1162 = vshrl.u32 %v1161, 7
        %v1163 = vsub.s32 %v1160, %v1162
        %v1164 = vrot.slane %v1156, %v1163
        %v1166 = vunpack.c.l.s4 1934713408
        %v1167 = vunpack.c.0.s8 %v1166
        %v1168 = vlaneseq
        %v1169 = vshrl.u32 %v1168, 7
        %v1170 = vsub.s32 %v1167, %v1169
        %v1171 = vrot.slane %v1157, %v1170
        %v1172 = vcombine.low %v1116, %v1132
        %v1173 = vcombine.high %v1116, %v1132
        %v1175 = vunpack.c.l.s4 1934713408
        %v1176 = vunpack.c.0.s8 %v1175
        %v1177 = vlaneseq
        %v1178 = vshrl.u32 %v1177, 7
        %v1179 = vsub.s32 %v1176, %v1178
        %v1180 = vrot.slane %v1172, %v1179
        %v1182 = vunpack.c.l.s4 1934713408
        %v1183 = vunpack.c.0.s8 %v1182
        %v1184 = vlaneseq
        %v1185 = vshrl.u32 %v1184, 7
        %v1186 = vsub.s32 %v1183, %v1185
        %v1187 = vrot.slane %v1173, %v1186
        %v1188 = vcombine.low %v1123, %v1139
        %v1189 = vcombine.high %v1123, %v1139
        %v1191 = vunpack.c.l.s4 1934713408
        %v1192 = vunpack.c.0.s8 %v1191
        %v1193 = vlaneseq
        %v1194 = vshrl.u32 %v1193, 7
        %v1195 = vsub.s32 %v1192, %v1194
        %v1196 = vrot.slane %v1188, %v1195
        %v1198 = vunpack.c.l.s4 1934713408
        %v1199 = vunpack.c.0.s8 %v1198
        %v1200 = vlaneseq
        %v1201 = vshrl.u32 %v1200, 7
        %v1202 = vsub.s32 %v1199, %v1201
        %v1203 = vrot.slane %v1189, %v1202
        %v1204 = vcombine.low %v1148, %v1180
        %v1205 = vcombine.high %v1148, %v1180
        %v1206 = vcombine.low %v1155, %v1187
        %v1207 = vcombine.high %v1155, %v1187
        %v1208 = vcombine.low %v1164, %v1196
        %v1209 = vcombine.high %v1164, %v1196
        %v1210 = vcombine.low %v1171, %v1203
        %v1211 = vcombine.high %v1171, %v1203
        %v1212 = vcombine.low %v285, %v293
        %v1213 = vcombine.high %v285, %v293
        %v1215 = vunpack.c.l.s4 1983009808
        %v1216 = vunpack.c.0.s8 %v1215
        %v1217 = vlaneseq
        %v1218 = vshrl.u32 %v1217, 7
        %v1219 = vsub.s32 %v1216, %v1218
        %v1220 = vrot.slane %v1212, %v1219
        %v1222 = vunpack.c.l.s4 1983009808
        %v1223 = vunpack.c.0.s8 %v1222
        %v1224 = vlaneseq
        %v1225 = vshrl.u32 %v1224, 7
        %v1226 = vsub.s32 %v1223, %v1225
        %v1227 = vrot.slane %v1213, %v1226
        %v1228 = vcombine.low %v289, %v297
        %v1229 = vcombine.high %v289, %v297
        %v1231 = vunpack.c.l.s4 1983009808
        %v1232 = vunpack.c.0.s8 %v1231
        %v1233 = vlaneseq
        %v1234 = vshrl.u32 %v1233, 7
        %v1235 = vsub.s32 %v1232, %v1234
        %v1236 = vrot.slane %v1228, %v1235
        %v1238 = vunpack.c.l.s4 1983009808
        %v1239 = vunpack.c.0.s8 %v1238
        %v1240 = vlaneseq
        %v1241 = vshrl.u32 %v1240, 7
        %v1242 = vsub.s32 %v1239, %v1241
        %v1243 = vrot.slane %v1229, %v1242
        %v1244 = vcombine.low %v315, %v325
        %v1245 = vcombine.high %v315, %v325
        %v1247 = vunpack.c.l.s4 1983009808
        %v1248 = vunpack.c.0.s8 %v1247
        %v1249 = vlaneseq
        %v1250 = vshrl.u32 %v1249, 7
        %v1251 = vsub.s32 %v1248, %v1250
        %v1252 = vrot.slane %v1244, %v1251
        %v1254 = vunpack.c.l.s4 1983009808
        %v1255 = vunpack.c.0.s8 %v1254
        %v1256 = vlaneseq
        %v1257 = vshrl.u32 %v1256, 7
        %v1258 = vsub.s32 %v1255, %v1257
        %v1259 = vrot.slane %v1245, %v1258
        %v1260 = vcombine.low %v320, %v330
        %v1261 = vcombine.high %v320, %v330
        %v1263 = vunpack.c.l.s4 1983009808
        %v1264 = vunpack.c.0.s8 %v1263
        %v1265 = vlaneseq
        %v1266 = vshrl.u32 %v1265, 7
        %v1267 = vsub.s32 %v1264, %v1266
        %v1268 = vrot.slane %v1260, %v1267
        %v1270 = vunpack.c.l.s4 1983009808
        %v1271 = vunpack.c.0.s8 %v1270
        %v1272 = vlaneseq
        %v1273 = vshrl.u32 %v1272, 7
        %v1274 = vsub.s32 %v1271, %v1273
        %v1275 = vrot.slane %v1261, %v1274
        %v1276 = vcombine.low %v1220, %v1236
        %v1277 = vcombine.high %v1220, %v1236
        %v1279 = vunpack.c.l.s4 1934713408
        %v1280 = vunpack.c.0.s8 %v1279
        %v1281 = vlaneseq
        %v1282 = vshrl.u32 %v1281, 7
        %v1283 = vsub.s32 %v1280, %v1282
        %v1284 = vrot.slane %v1276, %v1283
        %v1286 = vunpack.c.l.s4 1934713408
        %v1287 = vunpack.c.0.s8 %v1286
        %v1288 = vlaneseq
        %v1289 = vshrl.u32 %v1288, 7
        %v1290 = vsub.s32 %v1287, %v1289
        %v1291 = vrot.slane %v1277, %v1290
        %v1292 = vcombine.low %v1227, %v1243
        %v1293 = vcombine.high %v1227, %v1243
        %v1295 = vunpack.c.l.s4 1934713408
        %v1296 = vunpack.c.0.s8 %v1295
        %v1297 = vlaneseq
        %v1298 = vshrl.u32 %v1297, 7
        %v1299 = vsub.s32 %v1296, %v1298
        %v1300 = vrot.slane %v1292, %v1299
        %v1302 = vunpack.c.l.s4 1934713408
        %v1303 = vunpack.c.0.s8 %v1302
        %v1304 = vlaneseq
        %v1305 = vshrl.u32 %v1304, 7
        %v1306 = vsub.s32 %v1303, %v1305
        %v1307 = vrot.slane %v1293, %v1306
        %v1308 = vcombine.low %v1252, %v1268
        %v1309 = vcombine.high %v1252, %v1268
        %v1311 = vunpack.c.l.s4 1934713408
        %v1312 = vunpack.c.0.s8 %v1311
        %v1313 = vlaneseq
        %v1314 = vshrl.u32 %v1313, 7
        %v1315 = vsub.s32 %v1312, %v1314
        %v1316 = vrot.slane %v1308, %v1315
        %v1318 = vunpack.c.l.s4 1934713408
        %v1319 = vunpack.c.0.s8 %v1318
        %v1320 = vlaneseq
        %v1321 = vshrl.u32 %v1320, 7
        %v1322 = vsub.s32 %v1319, %v1321
        %v1323 = vrot.slane %v1309, %v1322
        %v1324 = vcombine.low %v1259, %v1275
        %v1325 = vcombine.high %v1259, %v1275
        %v1327 = vunpack.c.l.s4 1934713408
        %v1328 = vunpack.c.0.s8 %v1327
        %v1329 = vlaneseq
        %v1330 = vshrl.u32 %v1329, 7
        %v1331 = vsub.s32 %v1328, %v1330
        %v1332 = vrot.slane %v1324, %v1331
        %v1334 = vunpack.c.l.s4 1934713408
        %v1335 = vunpack.c.0.s8 %v1334
        %v1336 = vlaneseq
        %v1337 = vshrl.u32 %v1336, 7
        %v1338 = vsub.s32 %v1335, %v1337
        %v1339 = vrot.slane %v1325, %v1338
        %v1340 = vcombine.low %v1284, %v1316
        %v1341 = vcombine.high %v1284, %v1316
        %v1342 = vcombine.low %v1291, %v1323
        %v1343 = vcombine.high %v1291, %v1323
        %v1344 = vcombine.low %v1300, %v1332
        %v1345 = vcombine.high %v1300, %v1332
        %v1346 = vcombine.low %v1307, %v1339
        %v1347 = vcombine.high %v1307, %v1339
        %v1348 = vcombine.low %v342, %v350
        %v1349 = vcombine.high %v342, %v350
        %v1351 = vunpack.c.l.s4 1983009808
        %v1352 = vunpack.c.0.s8 %v1351
        %v1353 = vlaneseq
        %v1354 = vshrl.u32 %v1353, 7
        %v1355 = vsub.s32 %v1352, %v1354
        %v1356 = vrot.slane %v1348, %v1355
        %v1358 = vunpack.c.l.s4 1983009808
        %v1359 = vunpack.c.0.s8 %v1358
        %v1360 = vlaneseq
        %v1361 = vshrl.u32 %v1360, 7
        %v1362 = vsub.s32 %v1359, %v1361
        %v1363 = vrot.slane %v1349, %v1362
        %v1364 = vcombine.low %v346, %v354
        %v1365 = vcombine.high %v346, %v354
        %v1367 = vunpack.c.l.s4 1983009808
        %v1368 = vunpack.c.0.s8 %v1367
        %v1369 = vlaneseq
        %v1370 = vshrl.u32 %v1369, 7
        %v1371 = vsub.s32 %v1368, %v1370
        %v1372 = vrot.slane %v1364, %v1371
        %v1374 = vunpack.c.l.s4 1983009808
        %v1375 = vunpack.c.0.s8 %v1374
        %v1376 = vlaneseq
        %v1377 = vshrl.u32 %v1376, 7
        %v1378 = vsub.s32 %v1375, %v1377
        %v1379 = vrot.slane %v1365, %v1378
        %v1380 = vcombine.low %v366, %v374
        %v1381 = vcombine.high %v366, %v374
        %v1383 = vunpack.c.l.s4 1983009808
        %v1384 = vunpack.c.0.s8 %v1383
        %v1385 = vlaneseq
        %v1386 = vshrl.u32 %v1385, 7
        %v1387 = vsub.s32 %v1384, %v1386
        %v1388 = vrot.slane %v1380, %v1387
        %v1390 = vunpack.c.l.s4 1983009808
        %v1391 = vunpack.c.0.s8 %v1390
        %v1392 = vlaneseq
        %v1393 = vshrl.u32 %v1392, 7
        %v1394 = vsub.s32 %v1391, %v1393
        %v1395 = vrot.slane %v1381, %v1394
        %v1396 = vcombine.low %v370, %v378
        %v1397 = vcombine.high %v370, %v378
        %v1399 = vunpack.c.l.s4 1983009808
        %v1400 = vunpack.c.0.s8 %v1399
        %v1401 = vlaneseq
        %v1402 = vshrl.u32 %v1401, 7
        %v1403 = vsub.s32 %v1400, %v1402
        %v1404 = vrot.slane %v1396, %v1403
        %v1406 = vunpack.c.l.s4 1983009808
        %v1407 = vunpack.c.0.s8 %v1406
        %v1408 = vlaneseq
        %v1409 = vshrl.u32 %v1408, 7
        %v1410 = vsub.s32 %v1407, %v1409
        %v1411 = vrot.slane %v1397, %v1410
        %v1412 = vcombine.low %v1356, %v1372
        %v1413 = vcombine.high %v1356, %v1372
        %v1415 = vunpack.c.l.s4 1934713408
        %v1416 = vunpack.c.0.s8 %v1415
        %v1417 = vlaneseq
        %v1418 = vshrl.u32 %v1417, 7
        %v1419 = vsub.s32 %v1416, %v1418
        %v1420 = vrot.slane %v1412, %v1419
        %v1422 = vunpack.c.l.s4 1934713408
        %v1423 = vunpack.c.0.s8 %v1422
        %v1424 = vlaneseq
        %v1425 = vshrl.u32 %v1424, 7
        %v1426 = vsub.s32 %v1423, %v1425
        %v1427 = vrot.slane %v1413, %v1426
        %v1428 = vcombine.low %v1363, %v1379
        %v1429 = vcombine.high %v1363, %v1379
        %v1431 = vunpack.c.l.s4 1934713408
        %v1432 = vunpack.c.0.s8 %v1431
        %v1433 = vlaneseq
        %v1434 = vshrl.u32 %v1433, 7
        %v1435 = vsub.s32 %v1432, %v1434
        %v1436 = vrot.slane %v1428, %v1435
        %v1438 = vunpack.c.l.s4 1934713408
        %v1439 = vunpack.c.0.s8 %v1438
        %v1440 = vlaneseq
        %v1441 = vshrl.u32 %v1440, 7
        %v1442 = vsub.s32 %v1439, %v1441
        %v1443 = vrot.slane %v1429, %v1442
        %v1444 = vcombine.low %v1388, %v1404
        %v1445 = vcombine.high %v1388, %v1404
        %v1447 = vunpack.c.l.s4 1934713408
        %v1448 = vunpack.c.0.s8 %v1447
        %v1449 = vlaneseq
        %v1450 = vshrl.u32 %v1449, 7
        %v1451 = vsub.s32 %v1448, %v1450
        %v1452 = vrot.slane %v1444, %v1451
        %v1454 = vunpack.c.l.s4 1934713408
        %v1455 = vunpack.c.0.s8 %v1454
        %v1456 = vlaneseq
        %v1457 = vshrl.u32 %v1456, 7
        %v1458 = vsub.s32 %v1455, %v1457
        %v1459 = vrot.slane %v1445, %v1458
        %v1460 = vcombine.low %v1395, %v1411
        %v1461 = vcombine.high %v1395, %v1411
        %v1463 = vunpack.c.l.s4 1934713408
        %v1464 = vunpack.c.0.s8 %v1463
        %v1465 = vlaneseq
        %v1466 = vshrl.u32 %v1465, 7
        %v1467 = vsub.s32 %v1464, %v1466
        %v1468 = vrot.slane %v1460, %v1467
        %v1470 = vunpack.c.l.s4 1934713408
        %v1471 = vunpack.c.0.s8 %v1470
        %v1472 = vlaneseq
        %v1473 = vshrl.u32 %v1472, 7
        %v1474 = vsub.s32 %v1471, %v1473
        %v1475 = vrot.slane %v1461, %v1474
        %v1476 = vcombine.low %v1420, %v1452
        %v1477 = vcombine.high %v1420, %v1452
        %v1478 = vcombine.low %v1427, %v1459
        %v1479 = vcombine.high %v1427, %v1459
        %v1480 = vcombine.low %v1436, %v1468
        %v1481 = vcombine.high %v1436, %v1468
        %v1482 = vcombine.low %v1443, %v1475
        %v1483 = vcombine.high %v1443, %v1475
        %v1484 = vcombine.low %v392, %v402
        %v1485 = vcombine.high %v392, %v402
        %v1487 = vunpack.c.l.s4 1983009808
        %v1488 = vunpack.c.0.s8 %v1487
        %v1489 = vlaneseq
        %v1490 = vshrl.u32 %v1489, 7
        %v1491 = vsub.s32 %v1488, %v1490
        %v1492 = vrot.slane %v1484, %v1491
        %v1494 = vunpack.c.l.s4 1983009808
        %v1495 = vunpack.c.0.s8 %v1494
        %v1496 = vlaneseq
        %v1497 = vshrl.u32 %v1496, 7
        %v1498 = vsub.s32 %v1495, %v1497
        %v1499 = vrot.slane %v1485, %v1498
        %v1500 = vcombine.low %v397, %v407
        %v1501 = vcombine.high %v397, %v407
        %v1503 = vunpack.c.l.s4 1983009808
        %v1504 = vunpack.c.0.s8 %v1503
        %v1505 = vlaneseq
        %v1506 = vshrl.u32 %v1505, 7
        %v1507 = vsub.s32 %v1504, %v1506
        %v1508 = vrot.slane %v1500, %v1507
        %v1510 = vunpack.c.l.s4 1983009808
        %v1511 = vunpack.c.0.s8 %v1510
        %v1512 = vlaneseq
        %v1513 = vshrl.u32 %v1512, 7
        %v1514 = vsub.s32 %v1511, %v1513
        %v1515 = vrot.slane %v1501, %v1514
        %v1516 = vcombine.low %v419, %v427
        %v1517 = vcombine.high %v419, %v427
        %v1519 = vunpack.c.l.s4 1983009808
        %v1520 = vunpack.c.0.s8 %v1519
        %v1521 = vlaneseq
        %v1522 = vshrl.u32 %v1521, 7
        %v1523 = vsub.s32 %v1520, %v1522
        %v1524 = vrot.slane %v1516, %v1523
        %v1526 = vunpack.c.l.s4 1983009808
        %v1527 = vunpack.c.0.s8 %v1526
        %v1528 = vlaneseq
        %v1529 = vshrl.u32 %v1528, 7
        %v1530 = vsub.s32 %v1527, %v1529
        %v1531 = vrot.slane %v1517, %v1530
        %v1532 = vcombine.low %v423, %v431
        %v1533 = vcombine.high %v423, %v431
        %v1535 = vunpack.c.l.s4 1983009808
        %v1536 = vunpack.c.0.s8 %v1535
        %v1537 = vlaneseq
        %v1538 = vshrl.u32 %v1537, 7
        %v1539 = vsub.s32 %v1536, %v1538
        %v1540 = vrot.slane %v1532, %v1539
        %v1542 = vunpack.c.l.s4 1983009808
        %v1543 = vunpack.c.0.s8 %v1542
        %v1544 = vlaneseq
        %v1545 = vshrl.u32 %v1544, 7
        %v1546 = vsub.s32 %v1543, %v1545
        %v1547 = vrot.slane %v1533, %v1546
        %v1548 = vcombine.low %v1492, %v1508
        %v1549 = vcombine.high %v1492, %v1508
        %v1551 = vunpack.c.l.s4 1934713408
        %v1552 = vunpack.c.0.s8 %v1551
        %v1553 = vlaneseq
        %v1554 = vshrl.u32 %v1553, 7
        %v1555 = vsub.s32 %v1552, %v1554
        %v1556 = vrot.slane %v1548, %v1555
        %v1558 = vunpack.c.l.s4 1934713408
        %v1559 = vunpack.c.0.s8 %v1558
        %v1560 = vlaneseq
        %v1561 = vshrl.u32 %v1560, 7
        %v1562 = vsub.s32 %v1559, %v1561
        %v1563 = vrot.slane %v1549, %v1562
        %v1564 = vcombine.low %v1499, %v1515
        %v1565 = vcombine.high %v1499, %v1515
        %v1567 = vunpack.c.l.s4 1934713408
        %v1568 = vunpack.c.0.s8 %v1567
        %v1569 = vlaneseq
        %v1570 = vshrl.u32 %v1569, 7
        %v1571 = vsub.s32 %v1568, %v1570
        %v1572 = vrot.slane %v1564, %v1571
        %v1574 = vunpack.c.l.s4 1934713408
        %v1575 = vunpack.c.0.s8 %v1574
        %v1576 = vlaneseq
        %v1577 = vshrl.u32 %v1576, 7
        %v1578 = vsub.s32 %v1575, %v1577
        %v1579 = vrot.slane %v1565, %v1578
        %v1580 = vcombine.low %v1524, %v1540
        %v1581 = vcombine.high %v1524, %v1540
        %v1583 = vunpack.c.l.s4 1934713408
        %v1584 = vunpack.c.0.s8 %v1583
        %v1585 = vlaneseq
        %v1586 = vshrl.u32 %v1585, 7
        %v1587 = vsub.s32 %v1584, %v1586
        %v1588 = vrot.slane %v1580, %v1587
        %v1590 = vunpack.c.l.s4 1934713408
        %v1591 = vunpack.c.0.s8 %v1590
        %v1592 = vlaneseq
        %v1593 = vshrl.u32 %v1592, 7
        %v1594 = vsub.s32 %v1591, %v1593
        %v1595 = vrot.slane %v1581, %v1594
        %v1596 = vcombine.low %v1531, %v1547
        %v1597 = vcombine.high %v1531, %v1547
        %v1599 = vunpack.c.l.s4 1934713408
        %v1600 = vunpack.c.0.s8 %v1599
        %v1601 = vlaneseq
        %v1602 = vshrl.u32 %v1601, 7
        %v1603 = vsub.s32 %v1600, %v1602
        %v1604 = vrot.slane %v1596, %v1603
        %v1606 = vunpack.c.l.s4 1934713408
        %v1607 = vunpack.c.0.s8 %v1606
        %v1608 = vlaneseq
        %v1609 = vshrl.u32 %v1608, 7
        %v1610 = vsub.s32 %v1607, %v1609
        %v1611 = vrot.slane %v1597, %v1610
        %v1612 = vcombine.low %v1556, %v1588
        %v1613 = vcombine.high %v1556, %v1588
        %v1614 = vcombine.low %v1563, %v1595
        %v1615 = vcombine.high %v1563, %v1595
        %v1616 = vcombine.low %v1572, %v1604
        %v1617 = vcombine.high %v1572, %v1604
        %v1618 = vcombine.low %v1579, %v1611
        %v1619 = vcombine.high %v1579, %v1611
        %v1620 = vcombine.low %v443, %v451
        %v1621 = vcombine.high %v443, %v451
        %v1623 = vunpack.c.l.s4 1983009808
        %v1624 = vunpack.c.0.s8 %v1623
        %v1625 = vlaneseq
        %v1626 = vshrl.u32 %v1625, 7
        %v1627 = vsub.s32 %v1624, %v1626
        %v1628 = vrot.slane %v1620, %v1627
        %v1630 = vunpack.c.l.s4 1983009808
        %v1631 = vunpack.c.0.s8 %v1630
        %v1632 = vlaneseq
        %v1633 = vshrl.u32 %v1632, 7
        %v1634 = vsub.s32 %v1631, %v1633
        %v1635 = vrot.slane %v1621, %v1634
        %v1636 = vcombine.low %v447, %v455
        %v1637 = vcombine.high %v447, %v455
        %v1639 = vunpack.c.l.s4 1983009808
        %v1640 = vunpack.c.0.s8 %v1639
        %v1641 = vlaneseq
        %v1642 = vshrl.u32 %v1641, 7
        %v1643 = vsub.s32 %v1640, %v1642
        %v1644 = vrot.slane %v1636, %v1643
        %v1646 = vunpack.c.l.s4 1983009808
        %v1647 = vunpack.c.0.s8 %v1646
        %v1648 = vlaneseq
        %v1649 = vshrl.u32 %v1648, 7
        %v1650 = vsub.s32 %v1647, %v1649
        %v1651 = vrot.slane %v1637, %v1650
        %v1652 = vcombine.low %v1628, %v1644
        %v1653 = vcombine.high %v1628, %v1644
        %v1655 = vunpack.c.l.s4 1934713408
        %v1656 = vunpack.c.0.s8 %v1655
        %v1657 = vlaneseq
        %v1658 = vshrl.u32 %v1657, 7
        %v1659 = vsub.s32 %v1656, %v1658
        %v1660 = vrot.slane %v1652, %v1659
        %v1662 = vunpack.c.l.s4 1934713408
        %v1663 = vunpack.c.0.s8 %v1662
        %v1664 = vlaneseq
        %v1665 = vshrl.u32 %v1664, 7
        %v1666 = vsub.s32 %v1663, %v1665
        %v1667 = vrot.slane %v1653, %v1666
        %v1668 = vcombine.low %v1635, %v1651
        %v1669 = vcombine.high %v1635, %v1651
        %v1671 = vunpack.c.l.s4 1934713408
        %v1672 = vunpack.c.0.s8 %v1671
        %v1673 = vlaneseq
        %v1674 = vshrl.u32 %v1673, 7
        %v1675 = vsub.s32 %v1672, %v1674
        %v1676 = vrot.slane %v1668, %v1675
        %v1678 = vunpack.c.l.s4 1934713408
        %v1679 = vunpack.c.0.s8 %v1678
        %v1680 = vlaneseq
        %v1681 = vshrl.u32 %v1680, 7
        %v1682 = vsub.s32 %v1679, %v1681
        %v1683 = vrot.slane %v1669, %v1682
        %v1684 = vcombine.high %v1660, 0.0
        %v1685 = vcombine.high %v1667, 0.0
        %v1686 = vcombine.high %v1676, 0.0
        %v1687 = vcombine.high %v1683, 0.0
        %1693 = vrot.lane.b32.xlu0 %v593, 16
        %v1694 = vpop.permute.xlu0 %1693
        %1695 = vrot.lane.b32.xlu0 %v729, 16
        %v1696 = vpop.permute.xlu0 %1695
        %1697 = vrot.lane.b32.xlu0 %v865, 16
        %v1698 = vpop.permute.xlu0 %1697
        %1699 = vrot.lane.b32.xlu0 %v1001, 16
        %v1700 = vpop.permute.xlu0 %1699
        %1701 = vrot.lane.b32.xlu0 %v1072, 16
        %v1702 = vpop.permute.xlu0 %1701
        %1713 = vrot.lane.b32.xlu0 %v594, 32
        %v1714 = vpop.permute.xlu0 %1713
        %1715 = vrot.lane.b32.xlu0 %v730, 32
        %v1716 = vpop.permute.xlu0 %1715
        %1717 = vrot.lane.b32.xlu0 %v866, 32
        %v1718 = vpop.permute.xlu0 %1717
        %1719 = vrot.lane.b32.xlu0 %v1002, 32
        %v1720 = vpop.permute.xlu0 %1719
        %1721 = vrot.lane.b32.xlu0 %v1055, 32
        %v1722 = vpop.permute.xlu0 %1721
        %1733 = vrot.lane.b32.xlu0 %v595, 48
        %v1734 = vpop.permute.xlu0 %1733
        %1735 = vrot.lane.b32.xlu0 %v731, 48
        %v1736 = vpop.permute.xlu0 %1735
        %1737 = vrot.lane.b32.xlu0 %v867, 48
        %v1738 = vpop.permute.xlu0 %1737
        %1739 = vrot.lane.b32.xlu0 %v1003, 48
        %v1740 = vpop.permute.xlu0 %1739
        %1741 = vrot.lane.b32.xlu0 %v1073, 48
        %v1742 = vpop.permute.xlu0 %1741
        %1753 = vrot.lane.b32.xlu0 %v596, 64
        %v1754 = vpop.permute.xlu0 %1753
        %1755 = vrot.lane.b32.xlu0 %v732, 64
        %v1756 = vpop.permute.xlu0 %1755
        %1757 = vrot.lane.b32.xlu0 %v868, 64
        %v1758 = vpop.permute.xlu0 %1757
        %1759 = vrot.lane.b32.xlu0 %v1004, 64
        %v1760 = vpop.permute.xlu0 %1759
        %1761 = vrot.lane.b32.xlu0 %v1064, 64
        %v1762 = vpop.permute.xlu0 %1761
        %1773 = vrot.lane.b32.xlu0 %v597, 80
        %v1774 = vpop.permute.xlu0 %1773
        %1775 = vrot.lane.b32.xlu0 %v733, 80
        %v1776 = vpop.permute.xlu0 %1775
        %1777 = vrot.lane.b32.xlu0 %v869, 80
        %v1778 = vpop.permute.xlu0 %1777
        %1779 = vrot.lane.b32.xlu0 %v1005, 80
        %v1780 = vpop.permute.xlu0 %1779
        %1781 = vrot.lane.b32.xlu0 %v1074, 80
        %v1782 = vpop.permute.xlu0 %1781
        %1793 = vrot.lane.b32.xlu0 %v598, 96
        %v1794 = vpop.permute.xlu0 %1793
        %1795 = vrot.lane.b32.xlu0 %v734, 96
        %v1796 = vpop.permute.xlu0 %1795
        %1797 = vrot.lane.b32.xlu0 %v870, 96
        %v1798 = vpop.permute.xlu0 %1797
        %1799 = vrot.lane.b32.xlu0 %v1006, 96
        %v1800 = vpop.permute.xlu0 %1799
        %1801 = vrot.lane.b32.xlu0 %v1071, 96
        %v1802 = vpop.permute.xlu0 %1801
        %1813 = vrot.lane.b32.xlu0 %v599, 112
        %v1814 = vpop.permute.xlu0 %1813
        %1815 = vrot.lane.b32.xlu0 %v735, 112
        %v1816 = vpop.permute.xlu0 %1815
        %1817 = vrot.lane.b32.xlu0 %v871, 112
        %v1818 = vpop.permute.xlu0 %1817
        %1819 = vrot.lane.b32.xlu0 %v1007, 112
        %v1820 = vpop.permute.xlu0 %1819
        %1821 = vrot.lane.b32.xlu0 %v1075, 112
        %v1822 = vpop.permute.xlu0 %1821
        %1833 = vrot.lane.b32.xlu0 %v1205, 16
        %v1834 = vpop.permute.xlu0 %1833
        %1835 = vrot.lane.b32.xlu0 %v1341, 16
        %v1836 = vpop.permute.xlu0 %1835
        %1837 = vrot.lane.b32.xlu0 %v1477, 16
        %v1838 = vpop.permute.xlu0 %1837
        %1839 = vrot.lane.b32.xlu0 %v1613, 16
        %v1840 = vpop.permute.xlu0 %1839
        %1841 = vrot.lane.b32.xlu0 %v1684, 16
        %v1842 = vpop.permute.xlu0 %1841
        %1853 = vrot.lane.b32.xlu0 %v1206, 32
        %v1854 = vpop.permute.xlu0 %1853
        %1855 = vrot.lane.b32.xlu0 %v1342, 32
        %v1856 = vpop.permute.xlu0 %1855
        %1857 = vrot.lane.b32.xlu0 %v1478, 32
        %v1858 = vpop.permute.xlu0 %1857
        %1859 = vrot.lane.b32.xlu0 %v1614, 32
        %v1860 = vpop.permute.xlu0 %1859
        %1861 = vrot.lane.b32.xlu0 %v1667, 32
        %v1862 = vpop.permute.xlu0 %1861
        %1873 = vrot.lane.b32.xlu0 %v1207, 48
        %v1874 = vpop.permute.xlu0 %1873
        %1875 = vrot.lane.b32.xlu0 %v1343, 48
        %v1876 = vpop.permute.xlu0 %1875
        %1877 = vrot.lane.b32.xlu0 %v1479, 48
        %v1878 = vpop.permute.xlu0 %1877
        %1879 = vrot.lane.b32.xlu0 %v1615, 48
        %v1880 = vpop.permute.xlu0 %1879
        %1881 = vrot.lane.b32.xlu0 %v1685, 48
        %v1882 = vpop.permute.xlu0 %1881
        %1893 = vrot.lane.b32.xlu0 %v1208, 64
        %v1894 = vpop.permute.xlu0 %1893
        %1895 = vrot.lane.b32.xlu0 %v1344, 64
        %v1896 = vpop.permute.xlu0 %1895
        %1897 = vrot.lane.b32.xlu0 %v1480, 64
        %v1898 = vpop.permute.xlu0 %1897
        %1899 = vrot.lane.b32.xlu0 %v1616, 64
        %v1900 = vpop.permute.xlu0 %1899
        %1901 = vrot.lane.b32.xlu0 %v1676, 64
        %v1902 = vpop.permute.xlu0 %1901
        %1913 = vrot.lane.b32.xlu0 %v1209, 80
        %v1914 = vpop.permute.xlu0 %1913
        %1915 = vrot.lane.b32.xlu0 %v1345, 80
        %v1916 = vpop.permute.xlu0 %1915
        %1917 = vrot.lane.b32.xlu0 %v1481, 80
        %v1918 = vpop.permute.xlu0 %1917
        %1919 = vrot.lane.b32.xlu0 %v1617, 80
        %v1920 = vpop.permute.xlu0 %1919
        %1921 = vrot.lane.b32.xlu0 %v1686, 80
        %v1922 = vpop.permute.xlu0 %1921
        %1933 = vrot.lane.b32.xlu0 %v1210, 96
        %v1934 = vpop.permute.xlu0 %1933
        %1935 = vrot.lane.b32.xlu0 %v1346, 96
        %v1936 = vpop.permute.xlu0 %1935
        %1937 = vrot.lane.b32.xlu0 %v1482, 96
        %v1938 = vpop.permute.xlu0 %1937
        %1939 = vrot.lane.b32.xlu0 %v1618, 96
        %v1940 = vpop.permute.xlu0 %1939
        %1941 = vrot.lane.b32.xlu0 %v1683, 96
        %v1942 = vpop.permute.xlu0 %1941
        %1953 = vrot.lane.b32.xlu0 %v1211, 112
        %v1954 = vpop.permute.xlu0 %1953
        %1955 = vrot.lane.b32.xlu0 %v1347, 112
        %v1956 = vpop.permute.xlu0 %1955
        %1957 = vrot.lane.b32.xlu0 %v1483, 112
        %v1958 = vpop.permute.xlu0 %1957
        %1959 = vrot.lane.b32.xlu0 %v1619, 112
        %v1960 = vpop.permute.xlu0 %1959
        %1961 = vrot.lane.b32.xlu0 %v1687, 112
        %v1962 = vpop.permute.xlu0 %1961
        %vm1968 = vcmask 130048
        %v1969 = vsel %vm1968, %v592, %v1694
        %v1970 = vsel %vm1968, %v728, %v1696
        %v1971 = vsel %vm1968, %v864, %v1698
        %v1972 = vsel %vm1968, %v1000, %v1700
        %v1973 = vsel %vm1968, %v1048, %v1702
        %vm1974 = vcmask 261120
        %v1975 = vsel %vm1974, %v1969, %v1714
        %v1976 = vsel %vm1974, %v1970, %v1716
        %v1977 = vsel %vm1974, %v1971, %v1718
        %v1978 = vsel %vm1974, %v1972, %v1720
        %v1979 = vsel %vm1974, %v1973, %v1722
        %vm1980 = vcmask 392192
        %v1981 = vsel %vm1980, %v1975, %v1734
        %v1982 = vsel %vm1980, %v1976, %v1736
        %v1983 = vsel %vm1980, %v1977, %v1738
        %v1984 = vsel %vm1980, %v1978, %v1740
        %v1985 = vsel %vm1980, %v1979, %v1742
        %vm1986 = vcmask 523264
        %v1987 = vsel %vm1986, %v1981, %v1754
        %v1988 = vsel %vm1986, %v1982, %v1756
        %v1989 = vsel %vm1986, %v1983, %v1758
        %v1990 = vsel %vm1986, %v1984, %v1760
        %v1991 = vsel %vm1986, %v1985, %v1762
        %vm1992 = vcmask 654336
        %v1993 = vsel %vm1992, %v1987, %v1774
        %v1994 = vsel %vm1992, %v1988, %v1776
        %v1995 = vsel %vm1992, %v1989, %v1778
        %v1996 = vsel %vm1992, %v1990, %v1780
        %v1997 = vsel %vm1992, %v1991, %v1782
        %vm1998 = vcmask 785408
        %v1999 = vsel %vm1998, %v1993, %v1794
        %v2000 = vsel %vm1998, %v1994, %v1796
        %v2001 = vsel %vm1998, %v1995, %v1798
        %v2002 = vsel %vm1998, %v1996, %v1800
        %v2003 = vsel %vm1998, %v1997, %v1802
        %vm2004 = vcmask 916480
        %v2005 = vsel %vm2004, %v1999, %v1814
        %v2006 = vsel %vm2004, %v2000, %v1816
        %v2007 = vsel %vm2004, %v2001, %v1818
        %v2008 = vsel %vm2004, %v2002, %v1820
        %v2009 = vsel %vm2004, %v2003, %v1822
        %v2010 = vsel %vm1968, %v1204, %v1834
        %v2011 = vsel %vm1968, %v1340, %v1836
        %v2012 = vsel %vm1968, %v1476, %v1838
        %v2013 = vsel %vm1968, %v1612, %v1840
        %v2014 = vsel %vm1968, %v1660, %v1842
        %v2015 = vsel %vm1974, %v2010, %v1854
        %v2016 = vsel %vm1974, %v2011, %v1856
        %v2017 = vsel %vm1974, %v2012, %v1858
        %v2018 = vsel %vm1974, %v2013, %v1860
        %v2019 = vsel %vm1974, %v2014, %v1862
        %v2020 = vsel %vm1980, %v2015, %v1874
        %v2021 = vsel %vm1980, %v2016, %v1876
        %v2022 = vsel %vm1980, %v2017, %v1878
        %v2023 = vsel %vm1980, %v2018, %v1880
        %v2024 = vsel %vm1980, %v2019, %v1882
        %v2025 = vsel %vm1986, %v2020, %v1894
        %v2026 = vsel %vm1986, %v2021, %v1896
        %v2027 = vsel %vm1986, %v2022, %v1898
        %v2028 = vsel %vm1986, %v2023, %v1900
        %v2029 = vsel %vm1986, %v2024, %v1902
        %v2030 = vsel %vm1992, %v2025, %v1914
        %v2031 = vsel %vm1992, %v2026, %v1916
        %v2032 = vsel %vm1992, %v2027, %v1918
        %v2033 = vsel %vm1992, %v2028, %v1920
        %v2034 = vsel %vm1992, %v2029, %v1922
        %v2035 = vsel %vm1998, %v2030, %v1934
        %v2036 = vsel %vm1998, %v2031, %v1936
        %v2037 = vsel %vm1998, %v2032, %v1938
        %v2038 = vsel %vm1998, %v2033, %v1940
        %v2039 = vsel %vm1998, %v2034, %v1942
        %v2040 = vsel %vm2004, %v2035, %v1954
        %v2041 = vsel %vm2004, %v2036, %v1956
        %v2042 = vsel %vm2004, %v2037, %v1958
        %v2043 = vsel %vm2004, %v2038, %v1960
        %v2044 = vsel %vm2004, %v2039, %v1962
        %v2045 = vld [vmem:[#allocation6] sm:$0xff]
        %vm2046 = vcmask 293888
        %v2048 = vsel %vm2046, %v2045, 0
        %vm2050 = vcmask 1043456
        %v2052 = vsel %vm2050, %v2009, 0
        %v2055 = vsel %vm2050, %v2044, 0
        %2057 = vmatprep.subr.mxu0 %v2040
        %2058 = vmatpush1.msra.mxu0 %v2005
        %2059 = vmatprep.subr.mxu0 %v2041
        %2060 = vmatpush1.msra.mxu0 %v2006
        %2061 = vmatprep.subr.mxu0 %v2042
        %2062 = vmatpush1.msra.mxu0 %v2007
        %2063 = vmatprep.subr.mxu0 %v2043
        %2064 = vmatpush1.msra.mxu0 %v2008
        %2065 = vmatprep.subr.mxu0 %v2055
        %2066 = vmatpush1.msra.mxu0 %v2052
        %2067 = vmatprep.subr.mxu0 0.0
        %2068 = vmatpush1.msra.mxu0 0.0
        %2069 = vmatprep.subr.mxu0 0.0
        %2070 = vmatpush1.msra.mxu0 0.0
        %2071 = vmatprep.subr.mxu0 0.0
        %2072 = vmatpush1.msra.mxu0 0.0
        %2073 = vmatprep.subr.mxu0 0.0
        %2074 = vmatpush1.msra.mxu0 0.0
        %2075 = vmatprep.subr.mxu0 0.0
        %2076 = vmatpush1.msra.mxu0 0.0
        %2077 = vmatprep.subr.mxu0 0.0
        %2078 = vmatpush1.msra.mxu0 0.0
        %2079 = vmatprep.subr.mxu0 0.0
        %2080 = vmatpush1.msra.mxu0 0.0
        %2081 = vmatprep.subr.mxu0 0.0
        %2082 = vmatpush1.msra.mxu0 0.0
        %2083 = vmatprep.subr.mxu0 0.0
        %2084 = vmatpush1.msra.mxu0 0.0
        %2085 = vmatprep.subr.mxu0 0.0
        %2086 = vmatpush1.msra.mxu0 0.0
        %2087 = vmatprep.subr.mxu0 0.0
        %2088 = vmatpush1.msra.mxu0 0.0
        %2089 = vmatprep.subr.mxu0 0.0
        %2090 = vmatpush1.msra.mxu0 0.0
        %2091 = vmatprep.subr.mxu0 0.0
        %2092 = vmatpush1.msra.mxu0 0.0
        %2093 = vmatprep.subr.mxu0 0.0
        %2094 = vmatpush1.msra.mxu0 0.0
        %2095 = vmatprep.subr.mxu0 0.0
        %2096 = vmatpush1.msra.mxu0 0.0
        %2097 = vmatprep.subr.mxu0 0.0
        %2098 = vmatpush1.msra.mxu0 0.0
        %2099 = vmatprep.subr.mxu0 0.0
        %2100 = vmatpush1.msra.mxu0 0.0
        %2101 = vmatprep.subr.mxu0 0.0
        %2102 = vmatpush1.msra.mxu0 0.0
        %2103 = vmatprep.subr.mxu0 0.0
        %2104 = vmatpush1.msra.mxu0 0.0
        %2105 = vmatprep.subr.mxu0 0.0
        %2106 = vmatpush1.msra.mxu0 0.0
        %2107 = vmatprep.subr.mxu0 0.0
        %2108 = vmatpush1.msra.mxu0 0.0
        %2109 = vmatprep.subr.mxu0 0.0
        %2110 = vmatpush1.msra.mxu0 0.0
        %2111 = vmatprep.subr.mxu0 0.0
        %2112 = vmatpush1.msra.mxu0 0.0
        %2113 = vmatprep.subr.mxu0 0.0
        %2114 = vmatpush1.msra.mxu0 0.0
        %2115 = vmatprep.subr.mxu0 0.0
        %2116 = vmatpush1.msra.mxu0 0.0
        %2117 = vmatprep.subr.mxu0 0.0
        %2118 = vmatpush1.msra.mxu0 0.0
        %2119 = vmatprep.subr.mxu0 0.0
        %2120 = vmatpush1.msra.mxu0 0.0
        %2121 = vmatprep.mubr.f32.mxu0 0.0
        %2122 = vmatmul.mubr.f32.gmra.mrb[0].mxu0 %v2048
        %v2123 = vpop.f32.mrb[0].mxu0
        %v2124 = vadd.f32 0.0, %v2123
        %v2125 = vpop.f32.mrb[0].mxu0
        %v2126 = vadd.f32 0.0, %v2125
        %2127 = vdwg.mxu0
        %2128 = vst [vmem:[%s174] sm:$0xff] %v2124
        %2129 = vst [vmem:[%s174 + $0x8] sm:$0xff] %v2126
        %s2130 = sand.u32 %s75, 1
        %s2131 = scalar_lea.sflag [#allocation5], %s2130
        %s2132 = sand.u32 %s75, 1
        %s2133 = smul.addr %s2132, 16
        %s2134 = scalar_lea.vmem [#allocation8], %s2133
        // Predicated region
        $region37: #{tpu_custom_call.1} parent=27 // pred_check
          %p2135 = pneg %p85
        $region38: #{tpu_custom_call.1} parent=27 // pred_check_branch
          %2137 = sbr.rel (%p2135) target = $region40
        $region39: #{tpu_custom_call.1} parent=27 // pred_region
          %s2139 = ssub.s32 256, 256
          %2140 = vsyncadd %s2131, %s2139
          %s2141 = smul.addr %s20, 2
          %s2142 = smul.addr %s2141, 128
          %s2143 = scalar_lea.hbm %s2, %s2142
          %s2145 = sshll.u32 %s2134, 4
          %s2146 = int_to_ptr.vmem [resolvable:$true] %s2145
          %2148 = dma.vmem_to_hbm [thread:$0]  %s2146, 256, %s2143, %s2131
        $region40: #{tpu_custom_call.1} parent=27 // pred_fallthru
          _
      $region28: #{tpu_custom_call.1} parent=5 // pred_fallthru
        _
      %p2149 = scmp.le.s32.totalorder 2, %s15
      // Predicated region
      $region41: #{tpu_custom_call.1} parent=5 // pred_check
        %p2150 = pneg %p2149
      $region42: #{tpu_custom_call.1} parent=5 // pred_check_branch
        %2152 = sbr.rel (%p2150) target = $region44
      $region43: #{tpu_custom_call.1} parent=5 // pred_region
        %s2153 = ssub.s32 %s15, 2
        // Predicated region
        $region45: #{tpu_custom_call.1} parent=43 // pred_check
          %p2154 = pneg %p91
        $region46: #{tpu_custom_call.1} parent=43 // pred_check_branch
          %2156 = sbr.rel (%p2154) target = $region48
        $region47: #{tpu_custom_call.1} parent=43 // pred_region
          %s2157 = sand.u32 %s76, 1
          %s2158 = scalar_lea.sflag [#allocation5], %s2157
          %s2159 = sand.u32 %s76, 1
          %s2160 = smul.addr %s2159, 16
          %s2161 = scalar_lea.vmem [#allocation8], %s2160
          %2162 = dma.done %s2158, 256
        $region48: #{tpu_custom_call.1} parent=43 // pred_fallthru
          _
      $region44: #{tpu_custom_call.1} parent=5 // pred_fallthru
        _
    $region6: #{tpu_custom_call.1} parent=1 // loop_footer
      %s19 = sadd.s32 1, %s15
    $region7: #{tpu_custom_call.1} parent=1 // loop_footer_branch
      %14 = sbr.rel target = $region3
    $region8: #{tpu_custom_call.1} parent=1 // loop_exit
      _
    %2163 = vsyncpa [#allocation4], 1
    %s2164 = scalar_lea.sflag [#allocation4], 1
    %2165 = vsyncpa %s2164, 1
    %2166 = vsyncpa [#allocation7], 1
    %2167 = vsyncpa [#allocation5], 1
    %s2168 = scalar_lea.sflag [#allocation5], 1
    %2169 = vsyncpa %s2168, 1

</llo_original>
